<compile_context>
chip_gen: v6e
topology: v6e:2x2x1
jax: 0.10.0
libtpu: 0.0.40
codegen_flags: <defaults>
</compile_context>

<pallas_src>
import functools

import jax
import jax.numpy as jnp
from jax.experimental import pallas as pl
from jax.experimental.pallas import tpu as pltpu

BN_EPS = 1e-5
VMEM_LIMIT_BYTES = 48 * 1024 * 1024   # explicit scoped-VMEM limit (< v7x 64 MiB)


def _round_up(x, m):
    return ((x + m - 1) // m) * m


def _pad2(x, rows, cols):
    return jnp.pad(x, ((0, rows - x.shape[0]), (0, cols - x.shape[1])))


# ------------------------------ Pallas kernels ------------------------------

def _feature_transform_kernel(x_ref, w_ref, xw_ref):
    """xw = x @ W  (bf16 MXU inputs, f32 accumulate, bf16 output)."""
    xw_ref[...] = jnp.dot(
        x_ref[...], w_ref[...], preferred_element_type=jnp.float32
    ).astype(jnp.bfloat16)


def _aggregate_kernel(n_valid, a_ref, xw_ref, b_ref, h_ref, stats_ref, acc_ref):
    """h = relu(A_hat @ xw + b), tiled over (row tiles, K tiles).

    The epilogue also emits per-row-tile partial sums (sum(h), sum(h*h)) so the
    BatchNorm statistics need no extra pass over h.  Padded rows (>= n_valid)
    are zeroed so they never pollute the statistics.
    """
    i = pl.program_id(0)      # row tile
    k = pl.program_id(1)      # reduction tile over nodes

    @pl.when(k == 0)
    def _():
        acc_ref[...] = jnp.zeros_like(acc_ref)

    acc_ref[...] += jnp.dot(a_ref[...], xw_ref[...],
                            preferred_element_type=jnp.float32)

    @pl.when(k == pl.num_programs(1) - 1)
    def _():
        h = jnp.maximum(acc_ref[...] + b_ref[...], 0.0)          # bias + ReLU (f32)
        tm = h.shape[0]
        row = jax.lax.broadcasted_iota(jnp.int32, h.shape, 0) + i * tm
        h = jnp.where(row < n_valid, h, 0.0)                     # mask padded rows
        h_ref[...] = h
        stats_ref[0:1, 0:1, :] = jnp.sum(h, axis=0, keepdims=True).reshape(1, 1, -1)
        stats_ref[0:1, 1:2, :] = jnp.sum(h * h, axis=0, keepdims=True).reshape(1, 1, -1)


def _bn_pool_kernel(ss_ref, h_ref, s_ref, pooled_ref, xnext_ref):
    """BN affine (precomputed scale/shift), global_add_pool accumulation, and
    the bf16 activations fed to the next layer's feature transform."""
    i = pl.program_id(0)
    scale = ss_ref[0:1, :]
    shift = ss_ref[1:2, :]
    h_bn = h_ref[...] * scale + shift                            # f32 elementwise
    xnext_ref[...] = h_bn.astype(jnp.bfloat16)

    @pl.when(i == 0)
    def _():
        pooled_ref[...] = jnp.zeros_like(pooled_ref)

    pooled_ref[...] += jnp.dot(s_ref[...], h_bn,
                               preferred_element_type=jnp.float32)


# ------------------------------ pallas_call wrappers -------------------------

def _feature_transform(x_p, w_p, tm):
    n_pad, din_pad = x_p.shape
    d_pad = w_p.shape[1]
    return pl.pallas_call(
        _feature_transform_kernel,
        out_shape=jax.ShapeDtypeStruct((n_pad, d_pad), jnp.bfloat16),
        grid=(n_pad // tm,),
        in_specs=[
            pl.BlockSpec((tm, din_pad), lambda i: (i, 0)),
            pl.BlockSpec((din_pad, d_pad), lambda i: (0, 0)),
        ],
        out_specs=pl.BlockSpec((tm, d_pad), lambda i: (i, 0)),
        compiler_params=pltpu.CompilerParams(
            dimension_semantics=("parallel",),
            vmem_limit_bytes=VMEM_LIMIT_BYTES),
    )(x_p, w_p)


def _aggregate(a_p, xw, b_row, n_valid, tm, tk):
    n_pad = a_p.shape[0]
    d_pad = xw.shape[1]
    m_tiles = n_pad // tm
    k_tiles = n_pad // tk
    kernel = functools.partial(_aggregate_kernel, n_valid)
    return pl.pallas_call(
        kernel,
        out_shape=(
            jax.ShapeDtypeStruct((n_pad, d_pad), jnp.float32),
            jax.ShapeDtypeStruct((m_tiles, 2, d_pad), jnp.float32),
        ),
        grid=(m_tiles, k_tiles),
        in_specs=[
            pl.BlockSpec((tm, tk), lambda i, k: (i, k)),
            pl.BlockSpec((tk, d_pad), lambda i, k: (k, 0)),
            pl.BlockSpec((1, d_pad), lambda i, k: (0, 0)),
        ],
        out_specs=(
            pl.BlockSpec((tm, d_pad), lambda i, k: (i, 0)),
            pl.BlockSpec((1, 2, d_pad), lambda i, k: (i, 0, 0)),
        ),
        scratch_shapes=[pltpu.VMEM((tm, d_pad), jnp.float32)],
        compiler_params=pltpu.CompilerParams(
            dimension_semantics=("parallel", "arbitrary"),
            vmem_limit_bytes=VMEM_LIMIT_BYTES),
    )(a_p, xw, b_row)


def _bn_pool(ss, h_pre, s_p, tm):
    n_pad, d_pad = h_pre.shape
    g_pad = s_p.shape[0]
    m_tiles = n_pad // tm
    return pl.pallas_call(
        _bn_pool_kernel,
        out_shape=(
            jax.ShapeDtypeStruct((g_pad, d_pad), jnp.float32),
            jax.ShapeDtypeStruct((n_pad, d_pad), jnp.bfloat16),
        ),
        grid=(m_tiles,),
        in_specs=[
            pl.BlockSpec((2, d_pad), lambda i: (0, 0)),
            pl.BlockSpec((tm, d_pad), lambda i: (i, 0)),
            pl.BlockSpec((g_pad, tm), lambda i: (0, i)),
        ],
        out_specs=(
            pl.BlockSpec((g_pad, d_pad), lambda i: (0, 0)),   # resident accumulator
            pl.BlockSpec((tm, d_pad), lambda i: (i, 0)),
        ),
        compiler_params=pltpu.CompilerParams(
            dimension_semantics=("arbitrary",),   # pooled accumulates across row tiles
            vmem_limit_bytes=VMEM_LIMIT_BYTES),
    )(ss, h_pre, s_p)


# ------------------------------ forward pass --------------------------------

def encoder_forward(a_hat, s, x, params):
    """Pallas forward of EncoderGCN: returns [num_graphs, num_layers * dim]."""
    n, f_in = x.shape
    g = s.shape[0]
    d = params[0][0].shape[1]

    n_pad = _round_up(n, 128)
    d_pad = _round_up(d, 128)
    g_pad = _round_up(g, 8)
    tm = 256 if n_pad % 256 == 0 else 128
    tk = 512 if n_pad % 512 == 0 else (256 if n_pad % 256 == 0 else 128)

    a_p = _pad2(a_hat.astype(jnp.float32), n_pad, n_pad).astype(jnp.bfloat16)
    s_p = _pad2(s.astype(jnp.float32), g_pad, n_pad)
    x_cur = _pad2(x.astype(jnp.float32), n_pad,
                  _round_up(f_in, 128)).astype(jnp.bfloat16)

    pooled_per_layer = []
    for (w, b, gamma, beta) in params:
        din_pad = _round_up(w.shape[0], 128)
        w_p = _pad2(w.astype(jnp.float32), din_pad, d_pad).astype(jnp.bfloat16)
        b_p = jnp.pad(b.astype(jnp.float32), (0, d_pad - d)).reshape(1, d_pad)
        g_vec = jnp.pad(gamma.astype(jnp.float32), (0, d_pad - d))
        be_vec = jnp.pad(beta.astype(jnp.float32), (0, d_pad - d))

        # 1) feature transform (row-tiled)
        xw = _feature_transform(x_cur, w_p, tm)
        # 2) tiled A_hat @ xw with fused bias + ReLU and BN partial sums
        h_pre, stats = _aggregate(a_p, xw, b_p, n, tm, tk)

        # Per-feature BN scalar math on [2, d_pad] (tiny glue; biased variance).
        sums = jnp.sum(stats, axis=0)
        mean = sums[0] / n
        var = jnp.maximum(sums[1] / n - mean * mean, 0.0)
        inv_std = jax.lax.rsqrt(var + BN_EPS)
        scale = g_vec * inv_std
        shift = be_vec - mean * scale
        ss = jnp.stack([scale, shift], axis=0)          # [2, d_pad]

        # 3) BN affine + global_add_pool + next-layer bf16 activations
        pooled, x_cur = _bn_pool(ss, h_pre, s_p, tm)
        pooled_per_layer.append(pooled[:g, :d])

    return jnp.concatenate(pooled_per_layer, axis=1)    # [G, L*D]


# ------------------------------ plain-JAX glue -------------------------------

def build_normalized_adj(edge_index, num_nodes):
    """Dense GCN-normalized adjacency: D^{-1/2} (A + I) D^{-1/2}."""
    src, dst = edge_index[0], edge_index[1]
    adj = jnp.zeros((num_nodes, num_nodes), jnp.float32)
    adj = adj.at[src, dst].set(1.0)
    adj = jnp.maximum(adj, jnp.eye(num_nodes, dtype=jnp.float32))  # self loops
    deg = adj.sum(axis=1)
    dinv = jax.lax.rsqrt(deg)
    return dinv[:, None] * adj * dinv[None, :]


def build_pool_matrix(batch, num_graphs):
    """One-hot segment matrix S[g, n] = 1 iff node n belongs to graph g."""
    return (batch[None, :] == jnp.arange(num_graphs)[:, None]).astype(jnp.float32)


def init_params(key, num_features, dim, num_layers):
    params = []
    for i in range(num_layers):
        key, kw = jax.random.split(key)
        fan_in = num_features if i == 0 else dim
        w = jax.random.normal(kw, (fan_in, dim), jnp.float32) * 0.1
        b = jnp.zeros((dim,), jnp.float32)
        gamma = jnp.ones((dim,), jnp.float32)
        beta = jnp.zeros((dim,), jnp.float32)
        params.append((w, b, gamma, beta))
    return params


def reference_forward(a_hat, s, x, params):
    """Pure-JAX reference that mirrors the kernel's bf16-input / f32-accumulate
    matmul precision (so the check isolates kernel bugs from bf16 rounding)."""
    n = x.shape[0]
    a16 = a_hat.astype(jnp.bfloat16)
    x_cur = x.astype(jnp.bfloat16)
    pooled = []
    for (w, b, gamma, beta) in params:
        xw = jnp.dot(x_cur, w.astype(jnp.bfloat16),
                     preferred_element_type=jnp.float32).astype(jnp.bfloat16)
        h = jnp.dot(a16, xw, preferred_element_type=jnp.float32) + b[None, :]
        h = jnp.maximum(h, 0.0)
        mean = jnp.sum(h, axis=0) / n
        var = jnp.maximum(jnp.sum(h * h, axis=0) / n - mean * mean, 0.0)
        inv_std = jax.lax.rsqrt(var + BN_EPS)
        scale = gamma * inv_std
        shift = beta - mean * scale
        h_bn = h * scale[None, :] + shift[None, :]
        pooled.append(jnp.dot(s, h_bn, preferred_element_type=jnp.float32))
        x_cur = h_bn.astype(jnp.bfloat16)
    return jnp.concatenate(pooled, axis=1)


if __name__ == "__main__":
    key = jax.random.PRNGKey(0)

    # Small synthetic graph batch: 2 graphs x 4 nodes (N=8), F=4, D=32, L=3.
    num_nodes, num_features, dim, num_layers, num_graphs = 8, 4, 32, 3, 2

    key, kx = jax.random.split(key)
    x = jax.random.normal(kx, (num_nodes, num_features), jnp.float32)

    # Undirected ring within each graph (both directions listed).
    src = jnp.array([0, 1, 1, 2, 2, 3, 3, 0, 4, 5, 5, 6, 6, 7, 7, 4], jnp.int32)
    dst = jnp.array([1, 0, 2, 1, 3, 2, 0, 3, 5, 4, 6, 5, 7, 6, 4, 7], jnp.int32)
    edge_index = jnp.stack([src, dst], axis=0)
    batch = jnp.array([0, 0, 0, 0, 1, 1, 1, 1], jnp.int32)

    a_hat = build_normalized_adj(edge_index, num_nodes)
    s_mat = build_pool_matrix(batch, num_graphs)
    params = init_params(key, num_features, dim, num_layers)

    fwd = jax.jit(encoder_forward)
    out = jax.block_until_ready(fwd(a_hat, s_mat, x, params))

    ref = reference_forward(a_hat, s_mat, x, params)
    assert out.shape == (num_graphs, num_layers * dim)
    assert jnp.allclose(out, ref, atol=2e-2, rtol=2e-2), \
        float(jnp.max(jnp.abs(out - ref)))

    print("KERNEL_OK")
</pallas_src>

<mosaic_0001>
module attributes {stable_mosaic.version = 11 : i64} {
  func.func @_feature_transform_kernel(%arg0: i32, %arg1: memref<128x128xbf16, #tpu.memory_space<vmem>>, %arg2: memref<128x128xbf16, #tpu.memory_space<vmem>>, %arg3: memref<128x128xbf16, #tpu.memory_space<vmem>>) attributes {dimension_semantics = [#tpu.dimension_semantics<parallel>], iteration_bounds = array<i64: 1>, scalar_prefetch = 0 : i64, scratch_operands = 0 : i64, tpu.core_type = #tpu.core_type<tc>, window_params = [{transform_indices = @transform_0, window_bounds = array<i64: 128, 128>}, {pipeline_mode = #tpu.pipeline_mode<synchronous>, transform_indices = @transform_1, window_bounds = array<i64: 128, 128>}, {transform_indices = @transform_2, window_bounds = array<i64: 128, 128>}]} {
    %c0 = arith.constant 0 : index
    %c0_0 = arith.constant 0 : index
    %0 = vector.load %arg1[%c0, %c0_0] : memref<128x128xbf16, #tpu.memory_space<vmem>>, vector<128x128xbf16>
    %c0_1 = arith.constant 0 : index
    %c0_2 = arith.constant 0 : index
    %1 = vector.load %arg2[%c0_1, %c0_2] : memref<128x128xbf16, #tpu.memory_space<vmem>>, vector<128x128xbf16>
    %cst = arith.constant dense<0.000000e+00> : vector<128x128xf32>
    %2 = tpu.matmul %0, %1, %cst {dimension_numbers = #tpu.dot_dimension_numbers<[1], [0], [0], [1], [0, 0, 1, 1], [], []>} : vector<128x128xbf16>, vector<128x128xbf16>, vector<128x128xf32> -> vector<128x128xf32>
    %3 = arith.truncf %2 : vector<128x128xf32> to vector<128x128xbf16>
    %c0_3 = arith.constant 0 : index
    %c0_4 = arith.constant 0 : index
    %4 = vector.load %arg3[%c0_3, %c0_4] : memref<128x128xbf16, #tpu.memory_space<vmem>>, vector<128x128xbf16>
    tpu.vector_store %arg3[%c0_3, %c0_4], %3 {strides = array<i32>} : memref<128x128xbf16, #tpu.memory_space<vmem>>, vector<128x128xbf16>,
    return
  }
  func.func @transform_0(%arg0: i32) -> (i32, i32) {
    %c0_i32 = arith.constant 0 : i32
    %c0_i32_0 = arith.constant 0 : i32
    return %arg0, %c0_i32 : i32, i32
  }
  func.func @transform_1(%arg0: i32) -> (i32, i32) {
    %c0_i32 = arith.constant 0 : i32
    %c0_i32_0 = arith.constant 0 : i32
    %c0_i32_1 = arith.constant 0 : i32
    return %c0_i32, %c0_i32_0 : i32, i32
  }
  func.func @transform_2(%arg0: i32) -> (i32, i32) {
    %c0_i32 = arith.constant 0 : i32
    %c0_i32_0 = arith.constant 0 : i32
    return %arg0, %c0_i32 : i32, i32
  }
}

module attributes {stable_mosaic.version = 11 : i64} {
  func.func @_aggregate_kernel(%arg0: i32, %arg1: i32, %arg2: memref<128x128xbf16, #tpu.memory_space<vmem>>, %arg3: memref<128x128xbf16, #tpu.memory_space<vmem>>, %arg4: memref<1x128xf32, #tpu.memory_space<vmem>>, %arg5: memref<128x128xf32, #tpu.memory_space<vmem>>, %arg6: memref<1x2x128xf32, #tpu.memory_space<vmem>>, %arg7: memref<128x128xf32, #tpu.memory_space<vmem>>) attributes {dimension_semantics = [#tpu.dimension_semantics<parallel>, #tpu.dimension_semantics<arbitrary>], iteration_bounds = array<i64: 1, 1>, scalar_prefetch = 0 : i64, scratch_operands = 1 : i64, tpu.core_type = #tpu.core_type<tc>, window_params = [{transform_indices = @transform_0, window_bounds = array<i64: 128, 128>}, {transform_indices = @transform_1, window_bounds = array<i64: 128, 128>}, {pipeline_mode = #tpu.pipeline_mode<synchronous>, transform_indices = @transform_2, window_bounds = array<i64: 1, 128>}, {transform_indices = @transform_3, window_bounds = array<i64: 128, 128>}, {transform_indices = @transform_4, window_bounds = array<i64: 1, 2, 128>}]} {
    %c0_i32 = arith.constant 0 : i32
    %0 = arith.cmpi eq, %arg1, %c0_i32 : i32
    %1 = arith.extui %0 : i1 to i32
    %c0_i32_0 = arith.constant 0 : i32
    %2 = arith.cmpi ne, %1, %c0_i32_0 : i32
    scf.if %2 {
      %cst_10 = arith.constant 0.000000e+00 : f32
      %12 = vector.broadcast %cst_10 : f32 to vector<128x128xf32>
      %c0_11 = arith.constant 0 : index
      %c0_12 = arith.constant 0 : index
      %13 = vector.load %arg7[%c0_11, %c0_12] : memref<128x128xf32, #tpu.memory_space<vmem>>, vector<128x128xf32>
      tpu.vector_store %arg7[%c0_11, %c0_12], %12 {strides = array<i32>} : memref<128x128xf32, #tpu.memory_space<vmem>>, vector<128x128xf32>,
    } else {
    }
    %c0 = arith.constant 0 : index
    %c0_1 = arith.constant 0 : index
    %3 = vector.load %arg7[%c0, %c0_1] : memref<128x128xf32, #tpu.memory_space<vmem>>, vector<128x128xf32>
    %c0_2 = arith.constant 0 : index
    %c0_3 = arith.constant 0 : index
    %4 = vector.load %arg2[%c0_2, %c0_3] : memref<128x128xbf16, #tpu.memory_space<vmem>>, vector<128x128xbf16>
    %c0_4 = arith.constant 0 : index
    %c0_5 = arith.constant 0 : index
    %5 = vector.load %arg3[%c0_4, %c0_5] : memref<128x128xbf16, #tpu.memory_space<vmem>>, vector<128x128xbf16>
    %cst = arith.constant dense<0.000000e+00> : vector<128x128xf32>
    %6 = tpu.matmul %4, %5, %cst {dimension_numbers = #tpu.dot_dimension_numbers<[1], [0], [0], [1], [0, 0, 1, 1], [], []>} : vector<128x128xbf16>, vector<128x128xbf16>, vector<128x128xf32> -> vector<128x128xf32>
    %7 = arith.addf %3, %6 : vector<128x128xf32>
    %c0_6 = arith.constant 0 : index
    %c0_7 = arith.constant 0 : index
    %8 = vector.load %arg7[%c0_6, %c0_7] : memref<128x128xf32, #tpu.memory_space<vmem>>, vector<128x128xf32>
    tpu.vector_store %arg7[%c0_6, %c0_7], %7 {strides = array<i32>} : memref<128x128xf32, #tpu.memory_space<vmem>>, vector<128x128xf32>,
    %c0_i32_8 = arith.constant 0 : i32
    %9 = arith.cmpi eq, %arg1, %c0_i32_8 : i32
    %10 = arith.extui %9 : i1 to i32
    %c0_i32_9 = arith.constant 0 : i32
    %11 = arith.cmpi ne, %10, %c0_i32_9 : i32
    scf.if %11 {
      %c0_10 = arith.constant 0 : index
      %c0_11 = arith.constant 0 : index
      %12 = vector.load %arg7[%c0_10, %c0_11] : memref<128x128xf32, #tpu.memory_space<vmem>>, vector<128x128xf32>
      %c0_12 = arith.constant 0 : index
      %c0_13 = arith.constant 0 : index
      %13 = vector.load %arg4[%c0_12, %c0_13] : memref<1x128xf32, #tpu.memory_space<vmem>>, vector<1x128xf32>
      %14 = vector.broadcast %13 : vector<1x128xf32> to vector<128x128xf32>
      %15 = arith.addf %12, %14 : vector<128x128xf32>
      %cst_14 = arith.constant 0.000000e+00 : f32
      %16 = vector.broadcast %cst_14 : f32 to vector<128x128xf32>
      %17 = arith.maximumf %15, %16 : vector<128x128xf32>
      %18 = tpu.iota {dimensions = array<i32: 0>} : vector<128x128xi32>
      %c128_i32 = arith.constant 128 : i32
      %19 = arith.muli %arg0, %c128_i32 : i32
      %20 = vector.broadcast %19 : i32 to vector<128x128xi32>
      %21 = arith.addi %18, %20 : vector<128x128xi32>
      %c8_i32 = arith.constant 8 : i32
      %22 = vector.broadcast %c8_i32 : i32 to vector<128x128xi32>
      %23 = arith.cmpi slt, %21, %22 : vector<128x128xi32>
      %cst_15 = arith.constant 0.000000e+00 : f32
      %24 = vector.broadcast %cst_15 : f32 to vector<128x128xf32>
      %25 = arith.select %23, %17, %24 : vector<128x128xi1>, vector<128x128xf32>
      %c0_16 = arith.constant 0 : index
      %c0_17 = arith.constant 0 : index
      %26 = vector.load %arg5[%c0_16, %c0_17] : memref<128x128xf32, #tpu.memory_space<vmem>>, vector<128x128xf32>
      tpu.vector_store %arg5[%c0_16, %c0_17], %25 {strides = array<i32>} : memref<128x128xf32, #tpu.memory_space<vmem>>, vector<128x128xf32>,
      %cst_18 = arith.constant dense<0.000000e+00> : vector<128xf32>
      %27 = vector.multi_reduction <add>, %25, %cst_18 [0] : vector<128x128xf32> to vector<128xf32>
      %28 = vector.shape_cast %27 : vector<128xf32> to vector<1x128xf32>
      %29 = vector.shape_cast %28 : vector<1x128xf32> to vector<1x1x128xf32>
      %c0_19 = arith.constant 0 : index
      %c0_20 = arith.constant 0 : index
      %c0_21 = arith.constant 0 : index
      %30 = vector.load %arg6[%c0_19, %c0_20, %c0_21] : memref<1x2x128xf32, #tpu.memory_space<vmem>>, vector<1x1x128xf32>
      tpu.vector_store %arg6[%c0_19, %c0_20, %c0_21], %29 {strides = array<i32>} : memref<1x2x128xf32, #tpu.memory_space<vmem>>, vector<1x1x128xf32>,
      %31 = arith.mulf %25, %25 : vector<128x128xf32>
      %cst_22 = arith.constant dense<0.000000e+00> : vector<128xf32>
      %32 = vector.multi_reduction <add>, %31, %cst_22 [0] : vector<128x128xf32> to vector<128xf32>
      %33 = vector.shape_cast %32 : vector<128xf32> to vector<1x128xf32>
      %34 = vector.shape_cast %33 : vector<1x128xf32> to vector<1x1x128xf32>
      %c0_23 = arith.constant 0 : index
      %c1 = arith.constant 1 : index
      %c0_24 = arith.constant 0 : index
      %35 = vector.load %arg6[%c0_23, %c1, %c0_24] : memref<1x2x128xf32, #tpu.memory_space<vmem>>, vector<1x1x128xf32>
      tpu.vector_store %arg6[%c0_23, %c1, %c0_24], %34 {strides = array<i32>} : memref<1x2x128xf32, #tpu.memory_space<vmem>>, vector<1x1x128xf32>,
    } else {
    }
    return
  }
  func.func @transform_0(%arg0: i32, %arg1: i32) -> (i32, i32) {
    %c0_i32 = arith.constant 0 : i32
    return %arg0, %arg1 : i32, i32
  }
  func.func @transform_1(%arg0: i32, %arg1: i32) -> (i32, i32) {
    %c0_i32 = arith.constant 0 : i32
    %c0_i32_0 = arith.constant 0 : i32
    return %arg1, %c0_i32 : i32, i32
  }
  func.func @transform_2(%arg0: i32, %arg1: i32) -> (i32, i32) {
    %c0_i32 = arith.constant 0 : i32
    %c0_i32_0 = arith.constant 0 : i32
    %c0_i32_1 = arith.constant 0 : i32
    return %c0_i32, %c0_i32_0 : i32, i32
  }
  func.func @transform_3(%arg0: i32, %arg1: i32) -> (i32, i32) {
    %c0_i32 = arith.constant 0 : i32
    %c0_i32_0 = arith.constant 0 : i32
    return %arg0, %c0_i32 : i32, i32
  }
  func.func @transform_4(%arg0: i32, %arg1: i32) -> (i32, i32, i32) {
    %c0_i32 = arith.constant 0 : i32
    %c0_i32_0 = arith.constant 0 : i32
    %c0_i32_1 = arith.constant 0 : i32
    return %arg0, %c0_i32, %c0_i32_0 : i32, i32, i32
  }
}

module attributes {stable_mosaic.version = 11 : i64} {
  func.func @_bn_pool_kernel(%arg0: i32, %arg1: memref<2x128xf32, #tpu.memory_space<vmem>>, %arg2: memref<128x128xf32, #tpu.memory_space<vmem>>, %arg3: memref<8x128xf32, #tpu.memory_space<vmem>>, %arg4: memref<8x128xf32, #tpu.memory_space<vmem>>, %arg5: memref<128x128xbf16, #tpu.memory_space<vmem>>) attributes {dimension_semantics = [#tpu.dimension_semantics<arbitrary>], iteration_bounds = array<i64: 1>, scalar_prefetch = 0 : i64, scratch_operands = 0 : i64, tpu.core_type = #tpu.core_type<tc>, window_params = [{pipeline_mode = #tpu.pipeline_mode<synchronous>, transform_indices = @transform_0, window_bounds = array<i64: 2, 128>}, {transform_indices = @transform_1, window_bounds = array<i64: 128, 128>}, {transform_indices = @transform_2, window_bounds = array<i64: 8, 128>}, {pipeline_mode = #tpu.pipeline_mode<synchronous>, transform_indices = @transform_3, window_bounds = array<i64: 8, 128>}, {transform_indices = @transform_4, window_bounds = array<i64: 128, 128>}]} {
    %c0 = arith.constant 0 : index
    %c0_0 = arith.constant 0 : index
    %0 = vector.load %arg1[%c0, %c0_0] : memref<2x128xf32, #tpu.memory_space<vmem>>, vector<1x128xf32>
    %c1 = arith.constant 1 : index
    %c0_1 = arith.constant 0 : index
    %1 = vector.load %arg1[%c1, %c0_1] : memref<2x128xf32, #tpu.memory_space<vmem>>, vector<1x128xf32>
    %c0_2 = arith.constant 0 : index
    %c0_3 = arith.constant 0 : index
    %2 = vector.load %arg2[%c0_2, %c0_3] : memref<128x128xf32, #tpu.memory_space<vmem>>, vector<128x128xf32>
    %3 = vector.broadcast %0 : vector<1x128xf32> to vector<128x128xf32>
    %4 = arith.mulf %2, %3 : vector<128x128xf32>
    %5 = vector.broadcast %1 : vector<1x128xf32> to vector<128x128xf32>
    %6 = arith.addf %4, %5 : vector<128x128xf32>
    %7 = arith.truncf %6 : vector<128x128xf32> to vector<128x128xbf16>
    %c0_4 = arith.constant 0 : index
    %c0_5 = arith.constant 0 : index
    %8 = vector.load %arg5[%c0_4, %c0_5] : memref<128x128xbf16, #tpu.memory_space<vmem>>, vector<128x128xbf16>
    tpu.vector_store %arg5[%c0_4, %c0_5], %7 {strides = array<i32>} : memref<128x128xbf16, #tpu.memory_space<vmem>>, vector<128x128xbf16>,
    %c0_i32 = arith.constant 0 : i32
    %9 = arith.cmpi eq, %arg0, %c0_i32 : i32
    %10 = arith.extui %9 : i1 to i32
    %c0_i32_6 = arith.constant 0 : i32
    %11 = arith.cmpi ne, %10, %c0_i32_6 : i32
    scf.if %11 {
      %cst_13 = arith.constant 0.000000e+00 : f32
      %17 = vector.broadcast %cst_13 : f32 to vector<8x128xf32>
      %c0_14 = arith.constant 0 : index
      %c0_15 = arith.constant 0 : index
      %18 = vector.load %arg4[%c0_14, %c0_15] : memref<8x128xf32, #tpu.memory_space<vmem>>, vector<8x128xf32>
      tpu.vector_store %arg4[%c0_14, %c0_15], %17 {strides = array<i32>} : memref<8x128xf32, #tpu.memory_space<vmem>>, vector<8x128xf32>,
    } else {
    }
    %c0_7 = arith.constant 0 : index
    %c0_8 = arith.constant 0 : index
    %12 = vector.load %arg4[%c0_7, %c0_8] : memref<8x128xf32, #tpu.memory_space<vmem>>, vector<8x128xf32>
    %c0_9 = arith.constant 0 : index
    %c0_10 = arith.constant 0 : index
    %13 = vector.load %arg3[%c0_9, %c0_10] : memref<8x128xf32, #tpu.memory_space<vmem>>, vector<8x128xf32>
    %cst = arith.constant dense<0.000000e+00> : vector<8x128xf32>
    %14 = tpu.matmul %13, %6, %cst {dimension_numbers = #tpu.dot_dimension_numbers<[1], [0], [0], [1], [0, 0, 1, 1], [], []>} : vector<8x128xf32>, vector<128x128xf32>, vector<8x128xf32> -> vector<8x128xf32>
    %15 = arith.addf %12, %14 : vector<8x128xf32>
    %c0_11 = arith.constant 0 : index
    %c0_12 = arith.constant 0 : index
    %16 = vector.load %arg4[%c0_11, %c0_12] : memref<8x128xf32, #tpu.memory_space<vmem>>, vector<8x128xf32>
    tpu.vector_store %arg4[%c0_11, %c0_12], %15 {strides = array<i32>} : memref<8x128xf32, #tpu.memory_space<vmem>>, vector<8x128xf32>,
    return
  }
  func.func @transform_0(%arg0: i32) -> (i32, i32) {
    %c0_i32 = arith.constant 0 : i32
    %c0_i32_0 = arith.constant 0 : i32
    %c0_i32_1 = arith.constant 0 : i32
    return %c0_i32, %c0_i32_0 : i32, i32
  }
  func.func @transform_1(%arg0: i32) -> (i32, i32) {
    %c0_i32 = arith.constant 0 : i32
    %c0_i32_0 = arith.constant 0 : i32
    return %arg0, %c0_i32 : i32, i32
  }
  func.func @transform_2(%arg0: i32) -> (i32, i32) {
    %c0_i32 = arith.constant 0 : i32
    %c0_i32_0 = arith.constant 0 : i32
    return %c0_i32, %arg0 : i32, i32
  }
  func.func @transform_3(%arg0: i32) -> (i32, i32) {
    %c0_i32 = arith.constant 0 : i32
    %c0_i32_0 = arith.constant 0 : i32
    %c0_i32_1 = arith.constant 0 : i32
    return %c0_i32, %c0_i32_0 : i32, i32
  }
  func.func @transform_4(%arg0: i32) -> (i32, i32) {
    %c0_i32 = arith.constant 0 : i32
    %c0_i32_0 = arith.constant 0 : i32
    return %arg0, %c0_i32 : i32, i32
  }
}

module attributes {stable_mosaic.version = 11 : i64} {
  func.func @_bn_pool_kernel(%arg0: i32, %arg1: memref<2x128xf32, #tpu.memory_space<vmem>>, %arg2: memref<128x128xf32, #tpu.memory_space<vmem>>, %arg3: memref<8x128xf32, #tpu.memory_space<vmem>>, %arg4: memref<8x128xf32, #tpu.memory_space<vmem>>, %arg5: memref<128x128xbf16, #tpu.memory_space<vmem>>) attributes {dimension_semantics = [#tpu.dimension_semantics<arbitrary>], iteration_bounds = array<i64: 1>, scalar_prefetch = 0 : i64, scratch_operands = 0 : i64, tpu.core_type = #tpu.core_type<tc>, window_params = [{pipeline_mode = #tpu.pipeline_mode<synchronous>, transform_indices = @transform_0, window_bounds = array<i64: 2, 128>}, {transform_indices = @transform_1, window_bounds = array<i64: 128, 128>}, {transform_indices = @transform_2, window_bounds = array<i64: 8, 128>}, {pipeline_mode = #tpu.pipeline_mode<synchronous>, transform_indices = @transform_3, window_bounds = array<i64: 8, 128>}, {transform_indices = @transform_4, window_bounds = array<i64: 128, 128>}]} {
    %c0 = arith.constant 0 : index
    %c0_0 = arith.constant 0 : index
    %0 = vector.load %arg1[%c0, %c0_0] : memref<2x128xf32, #tpu.memory_space<vmem>>, vector<1x128xf32>
    %c1 = arith.constant 1 : index
    %c0_1 = arith.constant 0 : index
    %1 = vector.load %arg1[%c1, %c0_1] : memref<2x128xf32, #tpu.memory_space<vmem>>, vector<1x128xf32>
    %c0_2 = arith.constant 0 : index
    %c0_3 = arith.constant 0 : index
    %2 = vector.load %arg2[%c0_2, %c0_3] : memref<128x128xf32, #tpu.memory_space<vmem>>, vector<128x128xf32>
    %3 = vector.broadcast %0 : vector<1x128xf32> to vector<128x128xf32>
    %4 = arith.mulf %2, %3 : vector<128x128xf32>
    %5 = vector.broadcast %1 : vector<1x128xf32> to vector<128x128xf32>
    %6 = arith.addf %4, %5 : vector<128x128xf32>
    %7 = arith.truncf %6 : vector<128x128xf32> to vector<128x128xbf16>
    %c0_4 = arith.constant 0 : index
    %c0_5 = arith.constant 0 : index
    %8 = vector.load %arg5[%c0_4, %c0_5] : memref<128x128xbf16, #tpu.memory_space<vmem>>, vector<128x128xbf16>
    tpu.vector_store %arg5[%c0_4, %c0_5], %7 {strides = array<i32>} : memref<128x128xbf16, #tpu.memory_space<vmem>>, vector<128x128xbf16>,
    %c0_i32 = arith.constant 0 : i32
    %9 = arith.cmpi eq, %arg0, %c0_i32 : i32
    %10 = arith.extui %9 : i1 to i32
    %c0_i32_6 = arith.constant 0 : i32
    %11 = arith.cmpi ne, %10, %c0_i32_6 : i32
    scf.if %11 {
      %cst_13 = arith.constant 0.000000e+00 : f32
      %17 = vector.broadcast %cst_13 : f32 to vector<8x128xf32>
      %c0_14 = arith.constant 0 : index
      %c0_15 = arith.constant 0 : index
      %18 = vector.load %arg4[%c0_14, %c0_15] : memref<8x128xf32, #tpu.memory_space<vmem>>, vector<8x128xf32>
      tpu.vector_store %arg4[%c0_14, %c0_15], %17 {strides = array<i32>} : memref<8x128xf32, #tpu.memory_space<vmem>>, vector<8x128xf32>,
    } else {
    }
    %c0_7 = arith.constant 0 : index
    %c0_8 = arith.constant 0 : index
    %12 = vector.load %arg4[%c0_7, %c0_8] : memref<8x128xf32, #tpu.memory_space<vmem>>, vector<8x128xf32>
    %c0_9 = arith.constant 0 : index
    %c0_10 = arith.constant 0 : index
    %13 = vector.load %arg3[%c0_9, %c0_10] : memref<8x128xf32, #tpu.memory_space<vmem>>, vector<8x128xf32>
    %cst = arith.constant dense<0.000000e+00> : vector<8x128xf32>
    %14 = tpu.matmul %13, %6, %cst {dimension_numbers = #tpu.dot_dimension_numbers<[1], [0], [0], [1], [0, 0, 1, 1], [], []>} : vector<8x128xf32>, vector<128x128xf32>, vector<8x128xf32> -> vector<8x128xf32>
    %15 = arith.addf %12, %14 : vector<8x128xf32>
    %c0_11 = arith.constant 0 : index
    %c0_12 = arith.constant 0 : index
    %16 = vector.load %arg4[%c0_11, %c0_12] : memref<8x128xf32, #tpu.memory_space<vmem>>, vector<8x128xf32>
    tpu.vector_store %arg4[%c0_11, %c0_12], %15 {strides = array<i32>} : memref<8x128xf32, #tpu.memory_space<vmem>>, vector<8x128xf32>,
    return
  }
  func.func @transform_0(%arg0: i32) -> (i32, i32) {
    %c0_i32 = arith.constant 0 : i32
    %c0_i32_0 = arith.constant 0 : i32
    %c0_i32_1 = arith.constant 0 : i32
    return %c0_i32, %c0_i32_0 : i32, i32
  }
  func.func @transform_1(%arg0: i32) -> (i32, i32) {
    %c0_i32 = arith.constant 0 : i32
    %c0_i32_0 = arith.constant 0 : i32
    return %arg0, %c0_i32 : i32, i32
  }
  func.func @transform_2(%arg0: i32) -> (i32, i32) {
    %c0_i32 = arith.constant 0 : i32
    %c0_i32_0 = arith.constant 0 : i32
    return %c0_i32, %arg0 : i32, i32
  }
  func.func @transform_3(%arg0: i32) -> (i32, i32) {
    %c0_i32 = arith.constant 0 : i32
    %c0_i32_0 = arith.constant 0 : i32
    %c0_i32_1 = arith.constant 0 : i32
    return %c0_i32, %c0_i32_0 : i32, i32
  }
  func.func @transform_4(%arg0: i32) -> (i32, i32) {
    %c0_i32 = arith.constant 0 : i32
    %c0_i32_0 = arith.constant 0 : i32
    return %arg0, %c0_i32 : i32, i32
  }
}

</mosaic_0001>

<llo_original>
// kernel: encoder_forward.11
$region0: #{encoder_forward.11}
  #allocation0 [shape = 'u32[]', space=smem, size = 0x4, offset = 0x4, fixed_abs, tag = 'smem constant byte address 0x4 - core index']
  #allocation1 [shape = 'u32[144,128]{1,0:T(1,128)}', space=vmem, size = 0x12000, scoped, tag = 'internal scratch']
  %s0 = inlined_call_operand.vmem [shape: f32[2,128], index: 0, kind: input, shape index: {}]
  %s1 = inlined_call_operand.vmem [shape: f32[128,128], index: 1, kind: input, shape index: {}]
  %s2 = inlined_call_operand.vmem [shape: f32[8,128], index: 2, kind: input, shape index: {}]
  %s3 = inlined_call_operand.vmem [shape: f32[8,128], index: 3, kind: output, shape index: {0}]
  %s4 = inlined_call_operand.vmem [shape: bf16[128,128], index: 4, kind: output, shape index: {1}]
  %5 = xla_tuple %s3, %s4
  %s6 = sld [smem:[#allocation0]]
  $region34: #{encoder_forward.11} parent=0
    _
  %s8 = ssub.s32 1, %s6
  %s9 = scalar_select 0, %s8, %s6
  // Predicated region
  $region2: #{encoder_forward.11} parent=0 // pred_check
    _
  $region3: #{encoder_forward.11} parent=0 // pred_check_branch
    %11 = sbr.rel (0) target = $region5
  $region4: #{encoder_forward.11} parent=0 // pred_region
    _
  $region5: #{encoder_forward.11} parent=0 // pred_fallthru
    _
  // Predicated region
  $region6: #{encoder_forward.11} parent=0 // pred_check
    _
  $region7: #{encoder_forward.11} parent=0 // pred_check_branch
    %13 = sbr.rel (0) target = $region9
  $region8: #{encoder_forward.11} parent=0 // pred_region
    _
  $region9: #{encoder_forward.11} parent=0 // pred_fallthru
    _
  // Predicated region
  $region10: #{encoder_forward.11} parent=0 // pred_check
    _
  $region11: #{encoder_forward.11} parent=0 // pred_check_branch
    %15 = sbr.rel (0) target = $region13
  $region12: #{encoder_forward.11} parent=0 // pred_region
    _
  $region13: #{encoder_forward.11} parent=0 // pred_fallthru
    _
  %v16 = vld [vmem:[%s0] sm:$0x1]
  %v17 = vld [vmem:[%s0 + $0x1] sm:$0x1]
  %v18 = vld [vmem:[%s1] sm:$0xff]
  %v19 = vld [vmem:[%s1 + $0x8] sm:$0xff]
  %v20 = vld [vmem:[%s1 + $0x10] sm:$0xff]
  %v21 = vld [vmem:[%s1 + $0x18] sm:$0xff]
  %v22 = vld [vmem:[%s1 + $0x20] sm:$0xff]
  %v23 = vld [vmem:[%s1 + $0x28] sm:$0xff]
  %v24 = vld [vmem:[%s1 + $0x30] sm:$0xff]
  %v25 = vld [vmem:[%s1 + $0x38] sm:$0xff]
  %v26 = vld [vmem:[%s1 + $0x40] sm:$0xff]
  %v27 = vld [vmem:[%s1 + $0x48] sm:$0xff]
  %v28 = vld [vmem:[%s1 + $0x50] sm:$0xff]
  %v29 = vld [vmem:[%s1 + $0x58] sm:$0xff]
  %v30 = vld [vmem:[%s1 + $0x60] sm:$0xff]
  %v31 = vld [vmem:[%s1 + $0x68] sm:$0xff]
  %v32 = vld [vmem:[%s1 + $0x70] sm:$0xff]
  %v33 = vld [vmem:[%s1 + $0x78] sm:$0xff]
  %v34 = vlaneseq
  %v35 = vshrl.u32 %v34, 7
  %v36 = vsub.s32 0, %v35
  %v37 = vrot.slane %v16, %v36
  %v38 = vmul.f32 %v18, %v37
  %v39 = vmul.f32 %v19, %v37
  %v40 = vmul.f32 %v20, %v37
  %v41 = vmul.f32 %v21, %v37
  %v42 = vmul.f32 %v22, %v37
  %v43 = vmul.f32 %v23, %v37
  %v44 = vmul.f32 %v24, %v37
  %v45 = vmul.f32 %v25, %v37
  %v46 = vmul.f32 %v26, %v37
  %v47 = vmul.f32 %v27, %v37
  %v48 = vmul.f32 %v28, %v37
  %v49 = vmul.f32 %v29, %v37
  %v50 = vmul.f32 %v30, %v37
  %v51 = vmul.f32 %v31, %v37
  %v52 = vmul.f32 %v32, %v37
  %v53 = vmul.f32 %v33, %v37
  %v54 = vlaneseq
  %v55 = vshrl.u32 %v54, 7
  %v56 = vsub.s32 0, %v55
  %v57 = vrot.slane %v17, %v56
  %v58 = vadd.f32 %v38, %v57
  %v59 = vadd.f32 %v39, %v57
  %v60 = vadd.f32 %v40, %v57
  %v61 = vadd.f32 %v41, %v57
  %v62 = vadd.f32 %v42, %v57
  %v63 = vadd.f32 %v43, %v57
  %v64 = vadd.f32 %v44, %v57
  %v65 = vadd.f32 %v45, %v57
  %v66 = vadd.f32 %v46, %v57
  %v67 = vadd.f32 %v47, %v57
  %v68 = vadd.f32 %v48, %v57
  %v69 = vadd.f32 %v49, %v57
  %v70 = vadd.f32 %v50, %v57
  %v71 = vadd.f32 %v51, %v57
  %v72 = vadd.f32 %v52, %v57
  %v73 = vadd.f32 %v53, %v57
  %v74 = vpack.c.bf16 %v59, %v58
  %v75 = vpack.c.bf16 %v61, %v60
  %v76 = vpack.c.bf16 %v63, %v62
  %v77 = vpack.c.bf16 %v65, %v64
  %v78 = vpack.c.bf16 %v67, %v66
  %v79 = vpack.c.bf16 %v69, %v68
  %v80 = vpack.c.bf16 %v71, %v70
  %v81 = vpack.c.bf16 %v73, %v72
  %v90 = vunpack.c.l.b16 %v74
  %v91 = vunpack.c.h.b16 %v74
  %v92 = vunpack.c.l.b16 %v75
  %v93 = vunpack.c.h.b16 %v75
  %v94 = vunpack.c.l.b16 %v76
  %v95 = vunpack.c.h.b16 %v76
  %v96 = vunpack.c.l.b16 %v77
  %v97 = vunpack.c.h.b16 %v77
  %v98 = vunpack.c.l.b16 %v78
  %v99 = vunpack.c.h.b16 %v78
  %v100 = vunpack.c.l.b16 %v79
  %v101 = vunpack.c.h.b16 %v79
  %v102 = vunpack.c.l.b16 %v80
  %v103 = vunpack.c.h.b16 %v80
  %v104 = vunpack.c.l.b16 %v81
  %v105 = vunpack.c.h.b16 %v81
  %v106 = vpack.c.b16 %v90, %v90
  %v107 = vpack.c.b16 %v91, %v91
  %v108 = vpack.c.b16 %v92, %v92
  %v109 = vpack.c.b16 %v93, %v93
  %v110 = vpack.c.b16 %v94, %v94
  %v111 = vpack.c.b16 %v95, %v95
  %v112 = vpack.c.b16 %v96, %v96
  %v113 = vpack.c.b16 %v97, %v97
  %v114 = vpack.c.b16 %v98, %v98
  %v115 = vpack.c.b16 %v99, %v99
  %v116 = vpack.c.b16 %v100, %v100
  %v117 = vpack.c.b16 %v101, %v101
  %v118 = vpack.c.b16 %v102, %v102
  %v119 = vpack.c.b16 %v103, %v103
  %v120 = vpack.c.b16 %v104, %v104
  %v121 = vpack.c.b16 %v105, %v105
  %138 = vst [vmem:[%s4] sm:$0xf] %v106
  %139 = vst [vmem:[%s4 + $0x4] sm:$0xf] %v107
  %140 = vst [vmem:[%s4 + $0x8] sm:$0xf] %v108
  %141 = vst [vmem:[%s4 + $0xc] sm:$0xf] %v109
  %142 = vst [vmem:[%s4 + $0x10] sm:$0xf] %v110
  %143 = vst [vmem:[%s4 + $0x14] sm:$0xf] %v111
  %144 = vst [vmem:[%s4 + $0x18] sm:$0xf] %v112
  %145 = vst [vmem:[%s4 + $0x1c] sm:$0xf] %v113
  %146 = vst [vmem:[%s4 + $0x20] sm:$0xf] %v114
  %147 = vst [vmem:[%s4 + $0x24] sm:$0xf] %v115
  %148 = vst [vmem:[%s4 + $0x28] sm:$0xf] %v116
  %149 = vst [vmem:[%s4 + $0x2c] sm:$0xf] %v117
  %150 = vst [vmem:[%s4 + $0x30] sm:$0xf] %v118
  %151 = vst [vmem:[%s4 + $0x34] sm:$0xf] %v119
  %152 = vst [vmem:[%s4 + $0x38] sm:$0xf] %v120
  %153 = vst [vmem:[%s4 + $0x3c] sm:$0xf] %v121
  %p154 = scmp.eq.s32.totalorder 0, 0
  // Predicated region
  $region14: #{encoder_forward.11} parent=0 // pred_check
    %p155 = pneg %p154
  $region15: #{encoder_forward.11} parent=0 // pred_check_branch
    %157 = sbr.rel (%p155) target = $region17
  $region16: #{encoder_forward.11} parent=0 // pred_region
    %158 = vst [vmem:[%s3] sm:$0xff] 0.0
  $region17: #{encoder_forward.11} parent=0 // pred_fallthru
    _
  %v159 = vld [vmem:[%s3] sm:$0xff]
  %v160 = vld [vmem:[%s2] sm:$0xff]
  %161 = vmatprep.subr.mxu0 0.0
  %162 = vmatpush1.msra.mxu0 %v73
  %163 = vmatprep.subr.mxu0 0.0
  %164 = vmatpush1.msra.mxu0 %v72
  %165 = vmatprep.subr.mxu0 0.0
  %166 = vmatpush1.msra.mxu0 %v71
  %167 = vmatprep.subr.mxu0 0.0
  %168 = vmatpush1.msra.mxu0 %v70
  %169 = vmatprep.subr.mxu0 0.0
  %170 = vmatpush1.msra.mxu0 %v69
  %171 = vmatprep.subr.mxu0 0.0
  %172 = vmatpush1.msra.mxu0 %v68
  %173 = vmatprep.subr.mxu0 0.0
  %174 = vmatpush1.msra.mxu0 %v67
  %175 = vmatprep.subr.mxu0 0.0
  %176 = vmatpush1.msra.mxu0 %v66
  %177 = vmatprep.subr.mxu0 0.0
  %178 = vmatpush1.msra.mxu0 %v65
  %179 = vmatprep.subr.mxu0 0.0
  %180 = vmatpush1.msra.mxu0 %v64
  %181 = vmatprep.subr.mxu0 0.0
  %182 = vmatpush1.msra.mxu0 %v63
  %183 = vmatprep.subr.mxu0 0.0
  %184 = vmatpush1.msra.mxu0 %v62
  %185 = vmatprep.subr.mxu0 0.0
  %186 = vmatpush1.msra.mxu0 %v61
  %187 = vmatprep.subr.mxu0 0.0
  %188 = vmatpush1.msra.mxu0 %v60
  %189 = vmatprep.subr.mxu0 0.0
  %190 = vmatpush1.msra.mxu0 %v59
  %191 = vmatprep.subr.mxu0 0.0
  %192 = vmatpush1.msra.mxu0 %v58
  %193 = vmatprep.subr.mxu0 0.0
  %194 = vmatpush2.msra.mxu0 0.0
  %195 = vmatprep.subr.mxu0 0.0
  %196 = vmatpush2.msra.mxu0 0.0
  %197 = vmatprep.subr.mxu0 0.0
  %198 = vmatpush2.msra.mxu0 0.0
  %199 = vmatprep.subr.mxu0 0.0
  %200 = vmatpush2.msra.mxu0 0.0
  %201 = vmatprep.subr.mxu0 0.0
  %202 = vmatpush2.msra.mxu0 0.0
  %203 = vmatprep.subr.mxu0 0.0
  %204 = vmatpush2.msra.mxu0 0.0
  %205 = vmatprep.subr.mxu0 0.0
  %206 = vmatpush2.msra.mxu0 0.0
  %207 = vmatprep.subr.mxu0 0.0
  %208 = vmatpush2.msra.mxu0 0.0
  %209 = vmatprep.subr.mxu0 0.0
  %210 = vmatpush2.msra.mxu0 0.0
  %211 = vmatprep.subr.mxu0 0.0
  %212 = vmatpush2.msra.mxu0 0.0
  %213 = vmatprep.subr.mxu0 0.0
  %214 = vmatpush2.msra.mxu0 0.0
  %215 = vmatprep.subr.mxu0 0.0
  %216 = vmatpush2.msra.mxu0 0.0
  %217 = vmatprep.subr.mxu0 0.0
  %218 = vmatpush2.msra.mxu0 0.0
  %219 = vmatprep.subr.mxu0 0.0
  %220 = vmatpush2.msra.mxu0 0.0
  %221 = vmatprep.subr.mxu0 0.0
  %222 = vmatpush2.msra.mxu0 0.0
  %223 = vmatprep.subr.mxu0 0.0
  %224 = vmatpush2.msra.mxu0 0.0
  %225 = vmatprep.mubr.f32.mxu0 0.0
  %226 = vmatmul.mubr.f32.gmra.mxu0 %v160
  %v227 = vpop.f32.mrf.mxu0
  %v228 = vadd.f32 0.0, %v227
  %v229 = vpop.f32.mrf.mxu0
  %230 = vdwg.mxu0
  %v231 = vadd.f32 %v159, %v228
  %232 = vst [vmem:[%s3] sm:$0xff] %v231
  // Predicated region
  $region18: #{encoder_forward.11} parent=0 // pred_check
    _
  $region19: #{encoder_forward.11} parent=0 // pred_check_branch
    %234 = sbr.rel (0) target = $region21
  $region20: #{encoder_forward.11} parent=0 // pred_region
    _
  $region21: #{encoder_forward.11} parent=0 // pred_fallthru
    _
  // Predicated region
  $region22: #{encoder_forward.11} parent=0 // pred_check
    _
  $region23: #{encoder_forward.11} parent=0 // pred_check_branch
    %236 = sbr.rel (0) target = $region25
  $region24: #{encoder_forward.11} parent=0 // pred_region
    _
  $region25: #{encoder_forward.11} parent=0 // pred_fallthru
    _
  // Predicated region
  $region26: #{encoder_forward.11} parent=0 // pred_check
    _
  $region27: #{encoder_forward.11} parent=0 // pred_check_branch
    %238 = sbr.rel (0) target = $region29
  $region28: #{encoder_forward.11} parent=0 // pred_region
    _
  $region29: #{encoder_forward.11} parent=0 // pred_fallthru
    _
  // Predicated region
  $region30: #{encoder_forward.11} parent=0 // pred_check
    _
  $region31: #{encoder_forward.11} parent=0 // pred_check_branch
    %240 = sbr.rel (0) target = $region33
  $region32: #{encoder_forward.11} parent=0 // pred_region
    _
  $region33: #{encoder_forward.11} parent=0 // pred_fallthru
    _

// kernel: encoder_forward.9
$region0: #{encoder_forward.9}
  #allocation0 [shape = 'u32[]', space=smem, size = 0x4, offset = 0x4, fixed_abs, tag = 'smem constant byte address 0x4 - core index']
  #allocation1 [shape = 'u32[144,128]{1,0:T(1,128)}', space=vmem, size = 0x12000, scoped, tag = 'internal scratch']
  %s0 = inlined_call_operand.vmem [shape: bf16[128,128], index: 0, kind: input, shape index: {}]
  %s1 = inlined_call_operand.vmem [shape: bf16[128,128], index: 1, kind: input, shape index: {}]
  %s2 = inlined_call_operand.vmem [shape: bf16[128,128], index: 2, kind: output, shape index: {}]
  %s3 = sld [smem:[#allocation0]]
  $region18: #{encoder_forward.9} parent=0
    _
  %s5 = ssub.s32 1, %s3
  %s6 = scalar_select 0, %s5, %s3
  // Predicated region
  $region2: #{encoder_forward.9} parent=0 // pred_check
    _
  $region3: #{encoder_forward.9} parent=0 // pred_check_branch
    %8 = sbr.rel (0) target = $region5
  $region4: #{encoder_forward.9} parent=0 // pred_region
    _
  $region5: #{encoder_forward.9} parent=0 // pred_fallthru
    _
  // Predicated region
  $region6: #{encoder_forward.9} parent=0 // pred_check
    _
  $region7: #{encoder_forward.9} parent=0 // pred_check_branch
    %10 = sbr.rel (0) target = $region9
  $region8: #{encoder_forward.9} parent=0 // pred_region
    _
  $region9: #{encoder_forward.9} parent=0 // pred_fallthru
    _
  %v12 = vld [vmem:[%s0] sm:$0xf]
  %v13 = vld [vmem:[%s0 + $0x4] sm:$0xf]
  %v14 = vld [vmem:[%s0 + $0x8] sm:$0xf]
  %v15 = vld [vmem:[%s0 + $0xc] sm:$0xf]
  %v16 = vld [vmem:[%s0 + $0x10] sm:$0xf]
  %v17 = vld [vmem:[%s0 + $0x14] sm:$0xf]
  %v18 = vld [vmem:[%s0 + $0x18] sm:$0xf]
  %v19 = vld [vmem:[%s0 + $0x1c] sm:$0xf]
  %v20 = vld [vmem:[%s0 + $0x20] sm:$0xf]
  %v21 = vld [vmem:[%s0 + $0x24] sm:$0xf]
  %v22 = vld [vmem:[%s0 + $0x28] sm:$0xf]
  %v23 = vld [vmem:[%s0 + $0x2c] sm:$0xf]
  %v24 = vld [vmem:[%s0 + $0x30] sm:$0xf]
  %v25 = vld [vmem:[%s0 + $0x34] sm:$0xf]
  %v26 = vld [vmem:[%s0 + $0x38] sm:$0xf]
  %v27 = vld [vmem:[%s0 + $0x3c] sm:$0xf]
  %v28 = vld [vmem:[%s1] sm:$0xf]
  %v29 = vld [vmem:[%s1 + $0x4] sm:$0xf]
  %v30 = vld [vmem:[%s1 + $0x8] sm:$0xf]
  %v31 = vld [vmem:[%s1 + $0xc] sm:$0xf]
  %v32 = vld [vmem:[%s1 + $0x10] sm:$0xf]
  %v33 = vld [vmem:[%s1 + $0x14] sm:$0xf]
  %v34 = vld [vmem:[%s1 + $0x18] sm:$0xf]
  %v35 = vld [vmem:[%s1 + $0x1c] sm:$0xf]
  %v36 = vld [vmem:[%s1 + $0x20] sm:$0xf]
  %v37 = vld [vmem:[%s1 + $0x24] sm:$0xf]
  %v38 = vld [vmem:[%s1 + $0x28] sm:$0xf]
  %v39 = vld [vmem:[%s1 + $0x2c] sm:$0xf]
  %v40 = vld [vmem:[%s1 + $0x30] sm:$0xf]
  %v41 = vld [vmem:[%s1 + $0x34] sm:$0xf]
  %v42 = vld [vmem:[%s1 + $0x38] sm:$0xf]
  %v43 = vld [vmem:[%s1 + $0x3c] sm:$0xf]
  %v60 = vunpack.c.l.b16 %v12
  %v61 = vunpack.c.l.b16 %v13
  %v62 = vunpack.c.l.b16 %v14
  %v63 = vunpack.c.l.b16 %v15
  %v64 = vunpack.c.l.b16 %v16
  %v65 = vunpack.c.l.b16 %v17
  %v66 = vunpack.c.l.b16 %v18
  %v67 = vunpack.c.l.b16 %v19
  %v68 = vunpack.c.l.b16 %v20
  %v69 = vunpack.c.l.b16 %v21
  %v70 = vunpack.c.l.b16 %v22
  %v71 = vunpack.c.l.b16 %v23
  %v72 = vunpack.c.l.b16 %v24
  %v73 = vunpack.c.l.b16 %v25
  %v74 = vunpack.c.l.b16 %v26
  %v75 = vunpack.c.l.b16 %v27
  %v76 = vpack.c.b16 %v61, %v60
  %v77 = vpack.c.b16 %v63, %v62
  %v78 = vpack.c.b16 %v65, %v64
  %v79 = vpack.c.b16 %v67, %v66
  %v80 = vpack.c.b16 %v69, %v68
  %v81 = vpack.c.b16 %v71, %v70
  %v82 = vpack.c.b16 %v73, %v72
  %v83 = vpack.c.b16 %v75, %v74
  %v108 = vunpack.c.l.b16 %v28
  %v109 = vunpack.c.l.b16 %v29
  %v110 = vunpack.c.l.b16 %v30
  %v111 = vunpack.c.l.b16 %v31
  %v112 = vunpack.c.l.b16 %v32
  %v113 = vunpack.c.l.b16 %v33
  %v114 = vunpack.c.l.b16 %v34
  %v115 = vunpack.c.l.b16 %v35
  %v116 = vunpack.c.l.b16 %v36
  %v117 = vunpack.c.l.b16 %v37
  %v118 = vunpack.c.l.b16 %v38
  %v119 = vunpack.c.l.b16 %v39
  %v120 = vunpack.c.l.b16 %v40
  %v121 = vunpack.c.l.b16 %v41
  %v122 = vunpack.c.l.b16 %v42
  %v123 = vunpack.c.l.b16 %v43
  %v124 = vpack.c.b16 %v109, %v108
  %v125 = vpack.c.b16 %v111, %v110
  %v126 = vpack.c.b16 %v113, %v112
  %v127 = vpack.c.b16 %v115, %v114
  %v128 = vpack.c.b16 %v117, %v116
  %v129 = vpack.c.b16 %v119, %v118
  %v130 = vpack.c.b16 %v121, %v120
  %v131 = vpack.c.b16 %v123, %v122
  %140 = vmatprep.subr.bf16.mxu0 0
  %141 = vmatpush1.bf16.msra.mxu0 %v131
  %142 = vmatprep.subr.bf16.mxu0 0
  %143 = vmatpush1.bf16.msra.mxu0 %v130
  %144 = vmatprep.subr.bf16.mxu0 0
  %145 = vmatpush1.bf16.msra.mxu0 %v129
  %146 = vmatprep.subr.bf16.mxu0 0
  %147 = vmatpush1.bf16.msra.mxu0 %v128
  %148 = vmatprep.subr.bf16.mxu0 0
  %149 = vmatpush1.bf16.msra.mxu0 %v127
  %150 = vmatprep.subr.bf16.mxu0 0
  %151 = vmatpush1.bf16.msra.mxu0 %v126
  %152 = vmatprep.subr.bf16.mxu0 0
  %153 = vmatpush1.bf16.msra.mxu0 %v125
  %154 = vmatprep.subr.bf16.mxu0 0
  %155 = vmatpush1.bf16.msra.mxu0 %v124
  %156 = vmatprep.subr.bf16.mxu0 0
  %157 = vmatpush2.bf16.msra.mxu0 0
  %158 = vmatprep.subr.bf16.mxu0 0
  %159 = vmatpush2.bf16.msra.mxu0 0
  %160 = vmatprep.subr.bf16.mxu0 0
  %161 = vmatpush2.bf16.msra.mxu0 0
  %162 = vmatprep.subr.bf16.mxu0 0
  %163 = vmatpush2.bf16.msra.mxu0 0
  %164 = vmatprep.subr.bf16.mxu0 0
  %165 = vmatpush2.bf16.msra.mxu0 0
  %166 = vmatprep.subr.bf16.mxu0 0
  %167 = vmatpush2.bf16.msra.mxu0 0
  %168 = vmatprep.subr.bf16.mxu0 0
  %169 = vmatpush2.bf16.msra.mxu0 0
  %170 = vmatprep.subr.bf16.mxu0 0
  %171 = vmatpush2.bf16.msra.mxu0 0
  %172 = vmatprep.mubr.bf16.mxu0 0
  %173 = vmatmul.mubr.bf16.gmra.mxu0 %v76
  %v174 = vpop.f32.mrf.mxu0
  %v175 = vadd.f32 0.0, %v174
  %v176 = vpop.f32.mrf.mxu0
  %v177 = vpop.f32.mrf.mxu0
  %v178 = vadd.f32 0.0, %v177
  %v179 = vpop.f32.mrf.mxu0
  %180 = vmatprep.mubr.bf16.mxu0 0
  %181 = vmatmul.mubr.bf16.gmra.mxu0 %v77
  %v182 = vpop.f32.mrf.mxu0
  %v183 = vadd.f32 0.0, %v182
  %v184 = vpop.f32.mrf.mxu0
  %v185 = vpop.f32.mrf.mxu0
  %v186 = vadd.f32 0.0, %v185
  %v187 = vpop.f32.mrf.mxu0
  %188 = vmatprep.mubr.bf16.mxu0 0
  %189 = vmatmul.mubr.bf16.gmra.mxu0 %v78
  %v190 = vpop.f32.mrf.mxu0
  %v191 = vadd.f32 0.0, %v190
  %v192 = vpop.f32.mrf.mxu0
  %v193 = vpop.f32.mrf.mxu0
  %v194 = vadd.f32 0.0, %v193
  %v195 = vpop.f32.mrf.mxu0
  %196 = vmatprep.mubr.bf16.mxu0 0
  %197 = vmatmul.mubr.bf16.gmra.mxu0 %v79
  %v198 = vpop.f32.mrf.mxu0
  %v199 = vadd.f32 0.0, %v198
  %v200 = vpop.f32.mrf.mxu0
  %v201 = vpop.f32.mrf.mxu0
  %v202 = vadd.f32 0.0, %v201
  %v203 = vpop.f32.mrf.mxu0
  %204 = vmatprep.mubr.bf16.mxu0 0
  %205 = vmatmul.mubr.bf16.gmra.mxu0 %v80
  %v206 = vpop.f32.mrf.mxu0
  %v207 = vadd.f32 0.0, %v206
  %v208 = vpop.f32.mrf.mxu0
  %v209 = vpop.f32.mrf.mxu0
  %v210 = vadd.f32 0.0, %v209
  %v211 = vpop.f32.mrf.mxu0
  %212 = vmatprep.mubr.bf16.mxu0 0
  %213 = vmatmul.mubr.bf16.gmra.mxu0 %v81
  %v214 = vpop.f32.mrf.mxu0
  %v215 = vadd.f32 0.0, %v214
  %v216 = vpop.f32.mrf.mxu0
  %v217 = vpop.f32.mrf.mxu0
  %v218 = vadd.f32 0.0, %v217
  %v219 = vpop.f32.mrf.mxu0
  %220 = vmatprep.mubr.bf16.mxu0 0
  %221 = vmatmul.mubr.bf16.gmra.mxu0 %v82
  %v222 = vpop.f32.mrf.mxu0
  %v223 = vadd.f32 0.0, %v222
  %v224 = vpop.f32.mrf.mxu0
  %v225 = vpop.f32.mrf.mxu0
  %v226 = vadd.f32 0.0, %v225
  %v227 = vpop.f32.mrf.mxu0
  %228 = vmatprep.mubr.bf16.mxu0 0
  %229 = vmatmul.mubr.bf16.gmra.mxu0 %v83
  %v230 = vpop.f32.mrf.mxu0
  %v231 = vadd.f32 0.0, %v230
  %v232 = vpop.f32.mrf.mxu0
  %v233 = vpop.f32.mrf.mxu0
  %v234 = vadd.f32 0.0, %v233
  %v235 = vpop.f32.mrf.mxu0
  %236 = vdwg.mxu0
  %v237 = vpack.c.bf16 %v178, %v175
  %v238 = vpack.c.bf16 %v186, %v183
  %v239 = vpack.c.bf16 %v194, %v191
  %v240 = vpack.c.bf16 %v202, %v199
  %v241 = vpack.c.bf16 %v210, %v207
  %v242 = vpack.c.bf16 %v218, %v215
  %v243 = vpack.c.bf16 %v226, %v223
  %v244 = vpack.c.bf16 %v234, %v231
  %v253 = vunpack.c.l.b16 %v237
  %v254 = vunpack.c.h.b16 %v237
  %v255 = vunpack.c.l.b16 %v238
  %v256 = vunpack.c.h.b16 %v238
  %v257 = vunpack.c.l.b16 %v239
  %v258 = vunpack.c.h.b16 %v239
  %v259 = vunpack.c.l.b16 %v240
  %v260 = vunpack.c.h.b16 %v240
  %v261 = vunpack.c.l.b16 %v241
  %v262 = vunpack.c.h.b16 %v241
  %v263 = vunpack.c.l.b16 %v242
  %v264 = vunpack.c.h.b16 %v242
  %v265 = vunpack.c.l.b16 %v243
  %v266 = vunpack.c.h.b16 %v243
  %v267 = vunpack.c.l.b16 %v244
  %v268 = vunpack.c.h.b16 %v244
  %v269 = vpack.c.b16 %v253, %v253
  %v270 = vpack.c.b16 %v254, %v254
  %v271 = vpack.c.b16 %v255, %v255
  %v272 = vpack.c.b16 %v256, %v256
  %v273 = vpack.c.b16 %v257, %v257
  %v274 = vpack.c.b16 %v258, %v258
  %v275 = vpack.c.b16 %v259, %v259
  %v276 = vpack.c.b16 %v260, %v260
  %v277 = vpack.c.b16 %v261, %v261
  %v278 = vpack.c.b16 %v262, %v262
  %v279 = vpack.c.b16 %v263, %v263
  %v280 = vpack.c.b16 %v264, %v264
  %v281 = vpack.c.b16 %v265, %v265
  %v282 = vpack.c.b16 %v266, %v266
  %v283 = vpack.c.b16 %v267, %v267
  %v284 = vpack.c.b16 %v268, %v268
  %301 = vst [vmem:[%s2] sm:$0xf] %v269
  %302 = vst [vmem:[%s2 + $0x4] sm:$0xf] %v270
  %303 = vst [vmem:[%s2 + $0x8] sm:$0xf] %v271
  %304 = vst [vmem:[%s2 + $0xc] sm:$0xf] %v272
  %305 = vst [vmem:[%s2 + $0x10] sm:$0xf] %v273
  %306 = vst [vmem:[%s2 + $0x14] sm:$0xf] %v274
  %307 = vst [vmem:[%s2 + $0x18] sm:$0xf] %v275
  %308 = vst [vmem:[%s2 + $0x1c] sm:$0xf] %v276
  %309 = vst [vmem:[%s2 + $0x20] sm:$0xf] %v277
  %310 = vst [vmem:[%s2 + $0x24] sm:$0xf] %v278
  %311 = vst [vmem:[%s2 + $0x28] sm:$0xf] %v279
  %312 = vst [vmem:[%s2 + $0x2c] sm:$0xf] %v280
  %313 = vst [vmem:[%s2 + $0x30] sm:$0xf] %v281
  %314 = vst [vmem:[%s2 + $0x34] sm:$0xf] %v282
  %315 = vst [vmem:[%s2 + $0x38] sm:$0xf] %v283
  %316 = vst [vmem:[%s2 + $0x3c] sm:$0xf] %v284
  // Predicated region
  $region10: #{encoder_forward.9} parent=0 // pred_check
    _
  $region11: #{encoder_forward.9} parent=0 // pred_check_branch
    %318 = sbr.rel (0) target = $region13
  $region12: #{encoder_forward.9} parent=0 // pred_region
    _
  $region13: #{encoder_forward.9} parent=0 // pred_fallthru
    _
  // Predicated region
  $region14: #{encoder_forward.9} parent=0 // pred_check
    _
  $region15: #{encoder_forward.9} parent=0 // pred_check_branch
    %320 = sbr.rel (0) target = $region17
  $region16: #{encoder_forward.9} parent=0 // pred_region
    _
  $region17: #{encoder_forward.9} parent=0 // pred_fallthru
    _

// kernel: encoder_forward.10
$region0: #{encoder_forward.10}
  #allocation0 [shape = 'u32[]', space=smem, size = 0x4, offset = 0x4, fixed_abs, tag = 'smem constant byte address 0x4 - core index']
  #allocation1 [shape = 'u32[144,128]{1,0:T(1,128)}', space=vmem, size = 0x12000, scoped, tag = 'internal scratch']
  #allocation2 [shape = 'f32[128,128]{1,0:T(8,128)}', space=vmem, size = 0x10000, scoped, tag = 'scratch operand']
  %s0 = inlined_call_operand.vmem [shape: bf16[128,128], index: 0, kind: input, shape index: {}]
  %s1 = inlined_call_operand.vmem [shape: bf16[128,128], index: 1, kind: input, shape index: {}]
  %s2 = inlined_call_operand.vmem [shape: f32[1,128], index: 2, kind: input, shape index: {}]
  %s3 = inlined_call_operand.vmem [shape: f32[128,128], index: 3, kind: output, shape index: {0}]
  %s4 = inlined_call_operand.vmem [shape: f32[1,2,128], index: 4, kind: output, shape index: {1}]
  %5 = xla_tuple %s3, %s4
  %s6 = sld [smem:[#allocation0]]
  $region38: #{encoder_forward.10} parent=0
    _
  %s8 = ssub.s32 1, %s6
  %s9 = scalar_select 0, %s8, %s6
  // Predicated region
  $region2: #{encoder_forward.10} parent=0 // pred_check
    _
  $region3: #{encoder_forward.10} parent=0 // pred_check_branch
    %11 = sbr.rel (0) target = $region5
  $region4: #{encoder_forward.10} parent=0 // pred_region
    _
  $region5: #{encoder_forward.10} parent=0 // pred_fallthru
    _
  // Predicated region
  $region6: #{encoder_forward.10} parent=0 // pred_check
    _
  $region7: #{encoder_forward.10} parent=0 // pred_check_branch
    %13 = sbr.rel (0) target = $region9
  $region8: #{encoder_forward.10} parent=0 // pred_region
    _
  $region9: #{encoder_forward.10} parent=0 // pred_fallthru
    _
  // Predicated region
  $region10: #{encoder_forward.10} parent=0 // pred_check
    _
  $region11: #{encoder_forward.10} parent=0 // pred_check_branch
    %15 = sbr.rel (0) target = $region13
  $region12: #{encoder_forward.10} parent=0 // pred_region
    _
  $region13: #{encoder_forward.10} parent=0 // pred_fallthru
    _
  %p17 = scmp.eq.s32.totalorder 0, 0
  // Predicated region
  $region14: #{encoder_forward.10} parent=0 // pred_check
    %p18 = pneg %p17
  $region15: #{encoder_forward.10} parent=0 // pred_check_branch
    %20 = sbr.rel (%p18) target = $region17
  $region16: #{encoder_forward.10} parent=0 // pred_region
    %21 = vst [vmem:[#allocation2] sm:$0xff] 0.0
    %22 = vst [vmem:[#allocation2 + $0x8] sm:$0xff] 0.0
    %23 = vst [vmem:[#allocation2 + $0x10] sm:$0xff] 0.0
    %24 = vst [vmem:[#allocation2 + $0x18] sm:$0xff] 0.0
    %25 = vst [vmem:[#allocation2 + $0x20] sm:$0xff] 0.0
    %26 = vst [vmem:[#allocation2 + $0x28] sm:$0xff] 0.0
    %27 = vst [vmem:[#allocation2 + $0x30] sm:$0xff] 0.0
    %28 = vst [vmem:[#allocation2 + $0x38] sm:$0xff] 0.0
    %29 = vst [vmem:[#allocation2 + $0x40] sm:$0xff] 0.0
    %30 = vst [vmem:[#allocation2 + $0x48] sm:$0xff] 0.0
    %31 = vst [vmem:[#allocation2 + $0x50] sm:$0xff] 0.0
    %32 = vst [vmem:[#allocation2 + $0x58] sm:$0xff] 0.0
    %33 = vst [vmem:[#allocation2 + $0x60] sm:$0xff] 0.0
    %34 = vst [vmem:[#allocation2 + $0x68] sm:$0xff] 0.0
    %35 = vst [vmem:[#allocation2 + $0x70] sm:$0xff] 0.0
    %36 = vst [vmem:[#allocation2 + $0x78] sm:$0xff] 0.0
  $region17: #{encoder_forward.10} parent=0 // pred_fallthru
    _
  %v37 = vld [vmem:[#allocation2] sm:$0xff]
  %v38 = vld [vmem:[#allocation2 + $0x8] sm:$0xff]
  %v39 = vld [vmem:[#allocation2 + $0x10] sm:$0xff]
  %v40 = vld [vmem:[#allocation2 + $0x18] sm:$0xff]
  %v41 = vld [vmem:[#allocation2 + $0x20] sm:$0xff]
  %v42 = vld [vmem:[#allocation2 + $0x28] sm:$0xff]
  %v43 = vld [vmem:[#allocation2 + $0x30] sm:$0xff]
  %v44 = vld [vmem:[#allocation2 + $0x38] sm:$0xff]
  %v45 = vld [vmem:[#allocation2 + $0x40] sm:$0xff]
  %v46 = vld [vmem:[#allocation2 + $0x48] sm:$0xff]
  %v47 = vld [vmem:[#allocation2 + $0x50] sm:$0xff]
  %v48 = vld [vmem:[#allocation2 + $0x58] sm:$0xff]
  %v49 = vld [vmem:[#allocation2 + $0x60] sm:$0xff]
  %v50 = vld [vmem:[#allocation2 + $0x68] sm:$0xff]
  %v51 = vld [vmem:[#allocation2 + $0x70] sm:$0xff]
  %v52 = vld [vmem:[#allocation2 + $0x78] sm:$0xff]
  %v53 = vld [vmem:[%s0] sm:$0xf]
  %v54 = vld [vmem:[%s0 + $0x4] sm:$0xf]
  %v55 = vld [vmem:[%s0 + $0x8] sm:$0xf]
  %v56 = vld [vmem:[%s0 + $0xc] sm:$0xf]
  %v57 = vld [vmem:[%s0 + $0x10] sm:$0xf]
  %v58 = vld [vmem:[%s0 + $0x14] sm:$0xf]
  %v59 = vld [vmem:[%s0 + $0x18] sm:$0xf]
  %v60 = vld [vmem:[%s0 + $0x1c] sm:$0xf]
  %v61 = vld [vmem:[%s0 + $0x20] sm:$0xf]
  %v62 = vld [vmem:[%s0 + $0x24] sm:$0xf]
  %v63 = vld [vmem:[%s0 + $0x28] sm:$0xf]
  %v64 = vld [vmem:[%s0 + $0x2c] sm:$0xf]
  %v65 = vld [vmem:[%s0 + $0x30] sm:$0xf]
  %v66 = vld [vmem:[%s0 + $0x34] sm:$0xf]
  %v67 = vld [vmem:[%s0 + $0x38] sm:$0xf]
  %v68 = vld [vmem:[%s0 + $0x3c] sm:$0xf]
  %v69 = vld [vmem:[%s1] sm:$0xf]
  %v70 = vld [vmem:[%s1 + $0x4] sm:$0xf]
  %v71 = vld [vmem:[%s1 + $0x8] sm:$0xf]
  %v72 = vld [vmem:[%s1 + $0xc] sm:$0xf]
  %v73 = vld [vmem:[%s1 + $0x10] sm:$0xf]
  %v74 = vld [vmem:[%s1 + $0x14] sm:$0xf]
  %v75 = vld [vmem:[%s1 + $0x18] sm:$0xf]
  %v76 = vld [vmem:[%s1 + $0x1c] sm:$0xf]
  %v77 = vld [vmem:[%s1 + $0x20] sm:$0xf]
  %v78 = vld [vmem:[%s1 + $0x24] sm:$0xf]
  %v79 = vld [vmem:[%s1 + $0x28] sm:$0xf]
  %v80 = vld [vmem:[%s1 + $0x2c] sm:$0xf]
  %v81 = vld [vmem:[%s1 + $0x30] sm:$0xf]
  %v82 = vld [vmem:[%s1 + $0x34] sm:$0xf]
  %v83 = vld [vmem:[%s1 + $0x38] sm:$0xf]
  %v84 = vld [vmem:[%s1 + $0x3c] sm:$0xf]
  %v101 = vunpack.c.l.b16 %v53
  %v102 = vunpack.c.l.b16 %v54
  %v103 = vunpack.c.l.b16 %v55
  %v104 = vunpack.c.l.b16 %v56
  %v105 = vunpack.c.l.b16 %v57
  %v106 = vunpack.c.l.b16 %v58
  %v107 = vunpack.c.l.b16 %v59
  %v108 = vunpack.c.l.b16 %v60
  %v109 = vunpack.c.l.b16 %v61
  %v110 = vunpack.c.l.b16 %v62
  %v111 = vunpack.c.l.b16 %v63
  %v112 = vunpack.c.l.b16 %v64
  %v113 = vunpack.c.l.b16 %v65
  %v114 = vunpack.c.l.b16 %v66
  %v115 = vunpack.c.l.b16 %v67
  %v116 = vunpack.c.l.b16 %v68
  %v117 = vpack.c.b16 %v102, %v101
  %v118 = vpack.c.b16 %v104, %v103
  %v119 = vpack.c.b16 %v106, %v105
  %v120 = vpack.c.b16 %v108, %v107
  %v121 = vpack.c.b16 %v110, %v109
  %v122 = vpack.c.b16 %v112, %v111
  %v123 = vpack.c.b16 %v114, %v113
  %v124 = vpack.c.b16 %v116, %v115
  %v149 = vunpack.c.l.b16 %v69
  %v150 = vunpack.c.l.b16 %v70
  %v151 = vunpack.c.l.b16 %v71
  %v152 = vunpack.c.l.b16 %v72
  %v153 = vunpack.c.l.b16 %v73
  %v154 = vunpack.c.l.b16 %v74
  %v155 = vunpack.c.l.b16 %v75
  %v156 = vunpack.c.l.b16 %v76
  %v157 = vunpack.c.l.b16 %v77
  %v158 = vunpack.c.l.b16 %v78
  %v159 = vunpack.c.l.b16 %v79
  %v160 = vunpack.c.l.b16 %v80
  %v161 = vunpack.c.l.b16 %v81
  %v162 = vunpack.c.l.b16 %v82
  %v163 = vunpack.c.l.b16 %v83
  %v164 = vunpack.c.l.b16 %v84
  %v165 = vpack.c.b16 %v150, %v149
  %v166 = vpack.c.b16 %v152, %v151
  %v167 = vpack.c.b16 %v154, %v153
  %v168 = vpack.c.b16 %v156, %v155
  %v169 = vpack.c.b16 %v158, %v157
  %v170 = vpack.c.b16 %v160, %v159
  %v171 = vpack.c.b16 %v162, %v161
  %v172 = vpack.c.b16 %v164, %v163
  %181 = vmatprep.subr.bf16.mxu0 0
  %182 = vmatpush1.bf16.msra.mxu0 %v172
  %183 = vmatprep.subr.bf16.mxu0 0
  %184 = vmatpush1.bf16.msra.mxu0 %v171
  %185 = vmatprep.subr.bf16.mxu0 0
  %186 = vmatpush1.bf16.msra.mxu0 %v170
  %187 = vmatprep.subr.bf16.mxu0 0
  %188 = vmatpush1.bf16.msra.mxu0 %v169
  %189 = vmatprep.subr.bf16.mxu0 0
  %190 = vmatpush1.bf16.msra.mxu0 %v168
  %191 = vmatprep.subr.bf16.mxu0 0
  %192 = vmatpush1.bf16.msra.mxu0 %v167
  %193 = vmatprep.subr.bf16.mxu0 0
  %194 = vmatpush1.bf16.msra.mxu0 %v166
  %195 = vmatprep.subr.bf16.mxu0 0
  %196 = vmatpush1.bf16.msra.mxu0 %v165
  %197 = vmatprep.subr.bf16.mxu0 0
  %198 = vmatpush2.bf16.msra.mxu0 0
  %199 = vmatprep.subr.bf16.mxu0 0
  %200 = vmatpush2.bf16.msra.mxu0 0
  %201 = vmatprep.subr.bf16.mxu0 0
  %202 = vmatpush2.bf16.msra.mxu0 0
  %203 = vmatprep.subr.bf16.mxu0 0
  %204 = vmatpush2.bf16.msra.mxu0 0
  %205 = vmatprep.subr.bf16.mxu0 0
  %206 = vmatpush2.bf16.msra.mxu0 0
  %207 = vmatprep.subr.bf16.mxu0 0
  %208 = vmatpush2.bf16.msra.mxu0 0
  %209 = vmatprep.subr.bf16.mxu0 0
  %210 = vmatpush2.bf16.msra.mxu0 0
  %211 = vmatprep.subr.bf16.mxu0 0
  %212 = vmatpush2.bf16.msra.mxu0 0
  %213 = vmatprep.mubr.bf16.mxu0 0
  %214 = vmatmul.mubr.bf16.gmra.mxu0 %v117
  %v215 = vpop.f32.mrf.mxu0
  %v216 = vadd.f32 0.0, %v215
  %v217 = vpop.f32.mrf.mxu0
  %v218 = vpop.f32.mrf.mxu0
  %v219 = vadd.f32 0.0, %v218
  %v220 = vpop.f32.mrf.mxu0
  %221 = vmatprep.mubr.bf16.mxu0 0
  %222 = vmatmul.mubr.bf16.gmra.mxu0 %v118
  %v223 = vpop.f32.mrf.mxu0
  %v224 = vadd.f32 0.0, %v223
  %v225 = vpop.f32.mrf.mxu0
  %v226 = vpop.f32.mrf.mxu0
  %v227 = vadd.f32 0.0, %v226
  %v228 = vpop.f32.mrf.mxu0
  %229 = vmatprep.mubr.bf16.mxu0 0
  %230 = vmatmul.mubr.bf16.gmra.mxu0 %v119
  %v231 = vpop.f32.mrf.mxu0
  %v232 = vadd.f32 0.0, %v231
  %v233 = vpop.f32.mrf.mxu0
  %v234 = vpop.f32.mrf.mxu0
  %v235 = vadd.f32 0.0, %v234
  %v236 = vpop.f32.mrf.mxu0
  %237 = vmatprep.mubr.bf16.mxu0 0
  %238 = vmatmul.mubr.bf16.gmra.mxu0 %v120
  %v239 = vpop.f32.mrf.mxu0
  %v240 = vadd.f32 0.0, %v239
  %v241 = vpop.f32.mrf.mxu0
  %v242 = vpop.f32.mrf.mxu0
  %v243 = vadd.f32 0.0, %v242
  %v244 = vpop.f32.mrf.mxu0
  %245 = vmatprep.mubr.bf16.mxu0 0
  %246 = vmatmul.mubr.bf16.gmra.mxu0 %v121
  %v247 = vpop.f32.mrf.mxu0
  %v248 = vadd.f32 0.0, %v247
  %v249 = vpop.f32.mrf.mxu0
  %v250 = vpop.f32.mrf.mxu0
  %v251 = vadd.f32 0.0, %v250
  %v252 = vpop.f32.mrf.mxu0
  %253 = vmatprep.mubr.bf16.mxu0 0
  %254 = vmatmul.mubr.bf16.gmra.mxu0 %v122
  %v255 = vpop.f32.mrf.mxu0
  %v256 = vadd.f32 0.0, %v255
  %v257 = vpop.f32.mrf.mxu0
  %v258 = vpop.f32.mrf.mxu0
  %v259 = vadd.f32 0.0, %v258
  %v260 = vpop.f32.mrf.mxu0
  %261 = vmatprep.mubr.bf16.mxu0 0
  %262 = vmatmul.mubr.bf16.gmra.mxu0 %v123
  %v263 = vpop.f32.mrf.mxu0
  %v264 = vadd.f32 0.0, %v263
  %v265 = vpop.f32.mrf.mxu0
  %v266 = vpop.f32.mrf.mxu0
  %v267 = vadd.f32 0.0, %v266
  %v268 = vpop.f32.mrf.mxu0
  %269 = vmatprep.mubr.bf16.mxu0 0
  %270 = vmatmul.mubr.bf16.gmra.mxu0 %v124
  %v271 = vpop.f32.mrf.mxu0
  %v272 = vadd.f32 0.0, %v271
  %v273 = vpop.f32.mrf.mxu0
  %v274 = vpop.f32.mrf.mxu0
  %v275 = vadd.f32 0.0, %v274
  %v276 = vpop.f32.mrf.mxu0
  %277 = vdwg.mxu0
  %v278 = vadd.f32 %v37, %v216
  %v279 = vadd.f32 %v38, %v219
  %v280 = vadd.f32 %v39, %v224
  %v281 = vadd.f32 %v40, %v227
  %v282 = vadd.f32 %v41, %v232
  %v283 = vadd.f32 %v42, %v235
  %v284 = vadd.f32 %v43, %v240
  %v285 = vadd.f32 %v44, %v243
  %v286 = vadd.f32 %v45, %v248
  %v287 = vadd.f32 %v46, %v251
  %v288 = vadd.f32 %v47, %v256
  %v289 = vadd.f32 %v48, %v259
  %v290 = vadd.f32 %v49, %v264
  %v291 = vadd.f32 %v50, %v267
  %v292 = vadd.f32 %v51, %v272
  %v293 = vadd.f32 %v52, %v275
  %294 = vst [vmem:[#allocation2] sm:$0xff] %v278
  %295 = vst [vmem:[#allocation2 + $0x8] sm:$0xff] %v279
  %296 = vst [vmem:[#allocation2 + $0x10] sm:$0xff] %v280
  %297 = vst [vmem:[#allocation2 + $0x18] sm:$0xff] %v281
  %298 = vst [vmem:[#allocation2 + $0x20] sm:$0xff] %v282
  %299 = vst [vmem:[#allocation2 + $0x28] sm:$0xff] %v283
  %300 = vst [vmem:[#allocation2 + $0x30] sm:$0xff] %v284
  %301 = vst [vmem:[#allocation2 + $0x38] sm:$0xff] %v285
  %302 = vst [vmem:[#allocation2 + $0x40] sm:$0xff] %v286
  %303 = vst [vmem:[#allocation2 + $0x48] sm:$0xff] %v287
  %304 = vst [vmem:[#allocation2 + $0x50] sm:$0xff] %v288
  %305 = vst [vmem:[#allocation2 + $0x58] sm:$0xff] %v289
  %306 = vst [vmem:[#allocation2 + $0x60] sm:$0xff] %v290
  %307 = vst [vmem:[#allocation2 + $0x68] sm:$0xff] %v291
  %308 = vst [vmem:[#allocation2 + $0x70] sm:$0xff] %v292
  %309 = vst [vmem:[#allocation2 + $0x78] sm:$0xff] %v293
  // Predicated region
  $region18: #{encoder_forward.10} parent=0 // pred_check
    %p310 = pneg %p17
  $region19: #{encoder_forward.10} parent=0 // pred_check_branch
    %312 = sbr.rel (%p310) target = $region21
  $region20: #{encoder_forward.10} parent=0 // pred_region
    %v313 = vld [vmem:[#allocation2] sm:$0xff]
    %v314 = vld [vmem:[#allocation2 + $0x8] sm:$0xff]
    %v315 = vld [vmem:[#allocation2 + $0x10] sm:$0xff]
    %v316 = vld [vmem:[#allocation2 + $0x18] sm:$0xff]
    %v317 = vld [vmem:[#allocation2 + $0x20] sm:$0xff]
    %v318 = vld [vmem:[#allocation2 + $0x28] sm:$0xff]
    %v319 = vld [vmem:[#allocation2 + $0x30] sm:$0xff]
    %v320 = vld [vmem:[#allocation2 + $0x38] sm:$0xff]
    %v321 = vld [vmem:[#allocation2 + $0x40] sm:$0xff]
    %v322 = vld [vmem:[#allocation2 + $0x48] sm:$0xff]
    %v323 = vld [vmem:[#allocation2 + $0x50] sm:$0xff]
    %v324 = vld [vmem:[#allocation2 + $0x58] sm:$0xff]
    %v325 = vld [vmem:[#allocation2 + $0x60] sm:$0xff]
    %v326 = vld [vmem:[#allocation2 + $0x68] sm:$0xff]
    %v327 = vld [vmem:[#allocation2 + $0x70] sm:$0xff]
    %v328 = vld [vmem:[#allocation2 + $0x78] sm:$0xff]
    %v329 = vld [vmem:[%s2] sm:$0x1]
    %v331 = vlaneseq
    %v332 = vshrl.u32 %v331, 7
    %v333 = vsub.s32 0, %v332
    %v334 = vrot.slane %v329, %v333
    %v336 = vadd.f32 %v313, %v334
    %v337 = vadd.f32 %v314, %v334
    %v338 = vadd.f32 %v315, %v334
    %v339 = vadd.f32 %v316, %v334
    %v340 = vadd.f32 %v317, %v334
    %v341 = vadd.f32 %v318, %v334
    %v342 = vadd.f32 %v319, %v334
    %v343 = vadd.f32 %v320, %v334
    %v344 = vadd.f32 %v321, %v334
    %v345 = vadd.f32 %v322, %v334
    %v346 = vadd.f32 %v323, %v334
    %v347 = vadd.f32 %v324, %v334
    %v348 = vadd.f32 %v325, %v334
    %v349 = vadd.f32 %v326, %v334
    %v350 = vadd.f32 %v327, %v334
    %v351 = vadd.f32 %v328, %v334
    %v352 = vmax.f32 %v336, 0.0
    %v353 = vmax.f32 %v337, 0.0
    %v354 = vmax.f32 %v338, 0.0
    %v355 = vmax.f32 %v339, 0.0
    %v356 = vmax.f32 %v340, 0.0
    %v357 = vmax.f32 %v341, 0.0
    %v358 = vmax.f32 %v342, 0.0
    %v359 = vmax.f32 %v343, 0.0
    %v360 = vmax.f32 %v344, 0.0
    %v361 = vmax.f32 %v345, 0.0
    %v362 = vmax.f32 %v346, 0.0
    %v363 = vmax.f32 %v347, 0.0
    %v364 = vmax.f32 %v348, 0.0
    %v365 = vmax.f32 %v349, 0.0
    %v366 = vmax.f32 %v350, 0.0
    %v367 = vmax.f32 %v351, 0.0
    %v368 = vlaneseq
    %v369 = vshrl.u32 %v368, 7
    %v370 = vadd.s32 %v369, 8
    %v371 = vadd.s32 %v369, 16
    %v372 = vadd.s32 %v369, 24
    %v373 = vadd.s32 %v369, 32
    %v374 = vadd.s32 %v369, 40
    %v375 = vadd.s32 %v369, 48
    %v376 = vadd.s32 %v369, 56
    %v377 = vadd.s32 %v369, 64
    %v378 = vadd.s32 %v369, 72
    %v379 = vadd.s32 %v369, 80
    %v380 = vadd.s32 %v369, 88
    %v381 = vadd.s32 %v369, 96
    %v382 = vadd.s32 %v369, 104
    %v383 = vadd.s32 %v369, 112
    %v384 = vadd.s32 %v369, 120
    %s385 = smul.u32 0, 128
    %v386 = vstv %s385
    %v387 = vadd.s32 %v369, %v386
    %v388 = vadd.s32 %v370, %v386
    %v389 = vadd.s32 %v371, %v386
    %v390 = vadd.s32 %v372, %v386
    %v391 = vadd.s32 %v373, %v386
    %v392 = vadd.s32 %v374, %v386
    %v393 = vadd.s32 %v375, %v386
    %v394 = vadd.s32 %v376, %v386
    %v395 = vadd.s32 %v377, %v386
    %v396 = vadd.s32 %v378, %v386
    %v397 = vadd.s32 %v379, %v386
    %v398 = vadd.s32 %v380, %v386
    %v399 = vadd.s32 %v381, %v386
    %v400 = vadd.s32 %v382, %v386
    %v401 = vadd.s32 %v383, %v386
    %v402 = vadd.s32 %v384, %v386
    %vm403 = vcmp.lt.s32.totalorder %v387, 8
    %vm404 = vcmp.lt.s32.totalorder %v388, 8
    %vm405 = vcmp.lt.s32.totalorder %v389, 8
    %vm406 = vcmp.lt.s32.totalorder %v390, 8
    %vm407 = vcmp.lt.s32.totalorder %v391, 8
    %vm408 = vcmp.lt.s32.totalorder %v392, 8
    %vm409 = vcmp.lt.s32.totalorder %v393, 8
    %vm410 = vcmp.lt.s32.totalorder %v394, 8
    %vm411 = vcmp.lt.s32.totalorder %v395, 8
    %vm412 = vcmp.lt.s32.totalorder %v396, 8
    %vm413 = vcmp.lt.s32.totalorder %v397, 8
    %vm414 = vcmp.lt.s32.totalorder %v398, 8
    %vm415 = vcmp.lt.s32.totalorder %v399, 8
    %vm416 = vcmp.lt.s32.totalorder %v400, 8
    %vm417 = vcmp.lt.s32.totalorder %v401, 8
    %vm418 = vcmp.lt.s32.totalorder %v402, 8
    %v419 = vsel %vm403, %v352, 0.0
    %v420 = vsel %vm404, %v353, 0.0
    %v421 = vsel %vm405, %v354, 0.0
    %v422 = vsel %vm406, %v355, 0.0
    %v423 = vsel %vm407, %v356, 0.0
    %v424 = vsel %vm408, %v357, 0.0
    %v425 = vsel %vm409, %v358, 0.0
    %v426 = vsel %vm410, %v359, 0.0
    %v427 = vsel %vm411, %v360, 0.0
    %v428 = vsel %vm412, %v361, 0.0
    %v429 = vsel %vm413, %v362, 0.0
    %v430 = vsel %vm414, %v363, 0.0
    %v431 = vsel %vm415, %v364, 0.0
    %v432 = vsel %vm416, %v365, 0.0
    %v433 = vsel %vm417, %v366, 0.0
    %v434 = vsel %vm418, %v367, 0.0
    %435 = vst [vmem:[%s3] sm:$0xff] %v419
    %436 = vst [vmem:[%s3 + $0x8] sm:$0xff] %v420
    %437 = vst [vmem:[%s3 + $0x10] sm:$0xff] %v421
    %438 = vst [vmem:[%s3 + $0x18] sm:$0xff] %v422
    %439 = vst [vmem:[%s3 + $0x20] sm:$0xff] %v423
    %440 = vst [vmem:[%s3 + $0x28] sm:$0xff] %v424
    %441 = vst [vmem:[%s3 + $0x30] sm:$0xff] %v425
    %442 = vst [vmem:[%s3 + $0x38] sm:$0xff] %v426
    %443 = vst [vmem:[%s3 + $0x40] sm:$0xff] %v427
    %444 = vst [vmem:[%s3 + $0x48] sm:$0xff] %v428
    %445 = vst [vmem:[%s3 + $0x50] sm:$0xff] %v429
    %446 = vst [vmem:[%s3 + $0x58] sm:$0xff] %v430
    %447 = vst [vmem:[%s3 + $0x60] sm:$0xff] %v431
    %448 = vst [vmem:[%s3 + $0x68] sm:$0xff] %v432
    %449 = vst [vmem:[%s3 + $0x70] sm:$0xff] %v433
    %450 = vst [vmem:[%s3 + $0x78] sm:$0xff] %v434
    %v451 = vadd.f32 %v419, %v420
    %v452 = vadd.f32 %v451, %v421
    %v453 = vadd.f32 %v452, %v422
    %v454 = vadd.f32 %v453, %v423
    %v455 = vadd.f32 %v454, %v424
    %v456 = vadd.f32 %v455, %v425
    %v457 = vadd.f32 %v456, %v426
    %v458 = vadd.f32 %v457, %v427
    %v459 = vadd.f32 %v458, %v428
    %v460 = vadd.f32 %v459, %v429
    %v461 = vadd.f32 %v460, %v430
    %v462 = vadd.f32 %v461, %v431
    %v463 = vadd.f32 %v462, %v432
    %v464 = vadd.f32 %v463, %v433
    %v465 = vadd.f32 %v464, %v434
    %v466 = vrot.slane %v465, 4
    %v467 = vadd.f32 %v465, %v466
    %v468 = vrot.slane %v467, 2
    %v469 = vadd.f32 %v467, %v468
    %v470 = vrot.slane %v469, 1
    %v471 = vadd.f32 %v469, %v470
    %472 = vst [vmem:[%s4] sm:$0x1] %v471
    %v473 = vmul.f32 %v419, %v419
    %v474 = vmul.f32 %v420, %v420
    %v475 = vmul.f32 %v421, %v421
    %v476 = vmul.f32 %v422, %v422
    %v477 = vmul.f32 %v423, %v423
    %v478 = vmul.f32 %v424, %v424
    %v479 = vmul.f32 %v425, %v425
    %v480 = vmul.f32 %v426, %v426
    %v481 = vmul.f32 %v427, %v427
    %v482 = vmul.f32 %v428, %v428
    %v483 = vmul.f32 %v429, %v429
    %v484 = vmul.f32 %v430, %v430
    %v485 = vmul.f32 %v431, %v431
    %v486 = vmul.f32 %v432, %v432
    %v487 = vmul.f32 %v433, %v433
    %v488 = vmul.f32 %v434, %v434
    %v489 = vadd.f32 %v473, %v474
    %v490 = vadd.f32 %v489, %v475
    %v491 = vadd.f32 %v490, %v476
    %v492 = vadd.f32 %v491, %v477
    %v493 = vadd.f32 %v492, %v478
    %v494 = vadd.f32 %v493, %v479
    %v495 = vadd.f32 %v494, %v480
    %v496 = vadd.f32 %v495, %v481
    %v497 = vadd.f32 %v496, %v482
    %v498 = vadd.f32 %v497, %v483
    %v499 = vadd.f32 %v498, %v484
    %v500 = vadd.f32 %v499, %v485
    %v501 = vadd.f32 %v500, %v486
    %v502 = vadd.f32 %v501, %v487
    %v503 = vadd.f32 %v502, %v488
    %v504 = vrot.slane %v503, 4
    %v505 = vadd.f32 %v503, %v504
    %v506 = vrot.slane %v505, 2
    %v507 = vadd.f32 %v505, %v506
    %v508 = vrot.slane %v507, 1
    %v509 = vadd.f32 %v507, %v508
    %510 = vst [vmem:[%s4 + $0x1] sm:$0x1] %v509
  $region21: #{encoder_forward.10} parent=0 // pred_fallthru
    _
  // Predicated region
  $region22: #{encoder_forward.10} parent=0 // pred_check
    _
  $region23: #{encoder_forward.10} parent=0 // pred_check_branch
    %512 = sbr.rel (0) target = $region25
  $region24: #{encoder_forward.10} parent=0 // pred_region
    _
  $region25: #{encoder_forward.10} parent=0 // pred_fallthru
    _
  // Predicated region
  $region26: #{encoder_forward.10} parent=0 // pred_check
    _
  $region27: #{encoder_forward.10} parent=0 // pred_check_branch
    %514 = sbr.rel (0) target = $region29
  $region28: #{encoder_forward.10} parent=0 // pred_region
    _
  $region29: #{encoder_forward.10} parent=0 // pred_fallthru
    _
  // Predicated region
  $region30: #{encoder_forward.10} parent=0 // pred_check
    _
  $region31: #{encoder_forward.10} parent=0 // pred_check_branch
    %516 = sbr.rel (0) target = $region33
  $region32: #{encoder_forward.10} parent=0 // pred_region
    _
  $region33: #{encoder_forward.10} parent=0 // pred_fallthru
    _
  // Predicated region
  $region34: #{encoder_forward.10} parent=0 // pred_check
    _
  $region35: #{encoder_forward.10} parent=0 // pred_check_branch
    %518 = sbr.rel (0) target = $region37
  $region36: #{encoder_forward.10} parent=0 // pred_region
    _
  $region37: #{encoder_forward.10} parent=0 // pred_fallthru
    _

// kernel: encoder_forward.17
$region0: #{encoder_forward.17}
  #allocation0 [shape = 'u32[]', space=smem, size = 0x4, offset = 0x4, fixed_abs, tag = 'smem constant byte address 0x4 - core index']
  #allocation1 [shape = 'u32[144,128]{1,0:T(1,128)}', space=vmem, size = 0x12000, scoped, tag = 'internal scratch']
  %s0 = inlined_call_operand.vmem [shape: f32[2,128], index: 0, kind: input, shape index: {}]
  %s1 = inlined_call_operand.vmem [shape: f32[128,128], index: 1, kind: input, shape index: {}]
  %s2 = inlined_call_operand.vmem [shape: f32[8,128], index: 2, kind: input, shape index: {}]
  %s3 = inlined_call_operand.vmem [shape: f32[8,128], index: 3, kind: output, shape index: {0}]
  %s4 = inlined_call_operand.hbm [shape: bf16[128,128], index: 4, kind: output, shape index: {1}]
  %5 = xla_tuple %s3, %s4
  %s6 = sld [smem:[#allocation0]]
  $region34: #{encoder_forward.17} parent=0
    _
  %s8 = ssub.s32 1, %s6
  %s9 = scalar_select 0, %s8, %s6
  $region1: #{encoder_forward.17} parent=0
    #allocation2 [shape = 'u8[32768]{0}', space=vmem, size = 0x8000, scoped, tag = 'output window, operand 1, single buffered']
    #allocation3 [shape = 's32[1]{0}', space=sflag, size = 0x4, scoped, tag = 'scoped memory for encoder_forward.17']
    %10 = vsyncpa [#allocation3], 0
    // Predicated region
    $region2: #{encoder_forward.17} parent=1 // pred_check
      _
    $region3: #{encoder_forward.17} parent=1 // pred_check_branch
      %12 = sbr.rel (0) target = $region5
    $region4: #{encoder_forward.17} parent=1 // pred_region
      _
    $region5: #{encoder_forward.17} parent=1 // pred_fallthru
      _
    // Predicated region
    $region6: #{encoder_forward.17} parent=1 // pred_check
      _
    $region7: #{encoder_forward.17} parent=1 // pred_check_branch
      %14 = sbr.rel (0) target = $region9
    $region8: #{encoder_forward.17} parent=1 // pred_region
      _
    $region9: #{encoder_forward.17} parent=1 // pred_fallthru
      _
    // Predicated region
    $region10: #{encoder_forward.17} parent=1 // pred_check
      _
    $region11: #{encoder_forward.17} parent=1 // pred_check_branch
      %16 = sbr.rel (0) target = $region13
    $region12: #{encoder_forward.17} parent=1 // pred_region
      _
    $region13: #{encoder_forward.17} parent=1 // pred_fallthru
      _
    %v17 = vld [vmem:[%s0] sm:$0x1]
    %v18 = vld [vmem:[%s0 + $0x1] sm:$0x1]
    %v19 = vld [vmem:[%s1] sm:$0xff]
    %v20 = vld [vmem:[%s1 + $0x8] sm:$0xff]
    %v21 = vld [vmem:[%s1 + $0x10] sm:$0xff]
    %v22 = vld [vmem:[%s1 + $0x18] sm:$0xff]
    %v23 = vld [vmem:[%s1 + $0x20] sm:$0xff]
    %v24 = vld [vmem:[%s1 + $0x28] sm:$0xff]
    %v25 = vld [vmem:[%s1 + $0x30] sm:$0xff]
    %v26 = vld [vmem:[%s1 + $0x38] sm:$0xff]
    %v27 = vld [vmem:[%s1 + $0x40] sm:$0xff]
    %v28 = vld [vmem:[%s1 + $0x48] sm:$0xff]
    %v29 = vld [vmem:[%s1 + $0x50] sm:$0xff]
    %v30 = vld [vmem:[%s1 + $0x58] sm:$0xff]
    %v31 = vld [vmem:[%s1 + $0x60] sm:$0xff]
    %v32 = vld [vmem:[%s1 + $0x68] sm:$0xff]
    %v33 = vld [vmem:[%s1 + $0x70] sm:$0xff]
    %v34 = vld [vmem:[%s1 + $0x78] sm:$0xff]
    %v35 = vlaneseq
    %v36 = vshrl.u32 %v35, 7
    %v37 = vsub.s32 0, %v36
    %v38 = vrot.slane %v17, %v37
    %v39 = vmul.f32 %v19, %v38
    %v40 = vmul.f32 %v20, %v38
    %v41 = vmul.f32 %v21, %v38
    %v42 = vmul.f32 %v22, %v38
    %v43 = vmul.f32 %v23, %v38
    %v44 = vmul.f32 %v24, %v38
    %v45 = vmul.f32 %v25, %v38
    %v46 = vmul.f32 %v26, %v38
    %v47 = vmul.f32 %v27, %v38
    %v48 = vmul.f32 %v28, %v38
    %v49 = vmul.f32 %v29, %v38
    %v50 = vmul.f32 %v30, %v38
    %v51 = vmul.f32 %v31, %v38
    %v52 = vmul.f32 %v32, %v38
    %v53 = vmul.f32 %v33, %v38
    %v54 = vmul.f32 %v34, %v38
    %v55 = vlaneseq
    %v56 = vshrl.u32 %v55, 7
    %v57 = vsub.s32 0, %v56
    %v58 = vrot.slane %v18, %v57
    %v59 = vadd.f32 %v39, %v58
    %v60 = vadd.f32 %v40, %v58
    %v61 = vadd.f32 %v41, %v58
    %v62 = vadd.f32 %v42, %v58
    %v63 = vadd.f32 %v43, %v58
    %v64 = vadd.f32 %v44, %v58
    %v65 = vadd.f32 %v45, %v58
    %v66 = vadd.f32 %v46, %v58
    %v67 = vadd.f32 %v47, %v58
    %v68 = vadd.f32 %v48, %v58
    %v69 = vadd.f32 %v49, %v58
    %v70 = vadd.f32 %v50, %v58
    %v71 = vadd.f32 %v51, %v58
    %v72 = vadd.f32 %v52, %v58
    %v73 = vadd.f32 %v53, %v58
    %v74 = vadd.f32 %v54, %v58
    %v75 = vpack.c.bf16 %v60, %v59
    %v76 = vpack.c.bf16 %v62, %v61
    %v77 = vpack.c.bf16 %v64, %v63
    %v78 = vpack.c.bf16 %v66, %v65
    %v79 = vpack.c.bf16 %v68, %v67
    %v80 = vpack.c.bf16 %v70, %v69
    %v81 = vpack.c.bf16 %v72, %v71
    %v82 = vpack.c.bf16 %v74, %v73
    %v91 = vunpack.c.l.b16 %v75
    %v92 = vunpack.c.h.b16 %v75
    %v93 = vunpack.c.l.b16 %v76
    %v94 = vunpack.c.h.b16 %v76
    %v95 = vunpack.c.l.b16 %v77
    %v96 = vunpack.c.h.b16 %v77
    %v97 = vunpack.c.l.b16 %v78
    %v98 = vunpack.c.h.b16 %v78
    %v99 = vunpack.c.l.b16 %v79
    %v100 = vunpack.c.h.b16 %v79
    %v101 = vunpack.c.l.b16 %v80
    %v102 = vunpack.c.h.b16 %v80
    %v103 = vunpack.c.l.b16 %v81
    %v104 = vunpack.c.h.b16 %v81
    %v105 = vunpack.c.l.b16 %v82
    %v106 = vunpack.c.h.b16 %v82
    %v107 = vpack.c.b16 %v91, %v91
    %v108 = vpack.c.b16 %v92, %v92
    %v109 = vpack.c.b16 %v93, %v93
    %v110 = vpack.c.b16 %v94, %v94
    %v111 = vpack.c.b16 %v95, %v95
    %v112 = vpack.c.b16 %v96, %v96
    %v113 = vpack.c.b16 %v97, %v97
    %v114 = vpack.c.b16 %v98, %v98
    %v115 = vpack.c.b16 %v99, %v99
    %v116 = vpack.c.b16 %v100, %v100
    %v117 = vpack.c.b16 %v101, %v101
    %v118 = vpack.c.b16 %v102, %v102
    %v119 = vpack.c.b16 %v103, %v103
    %v120 = vpack.c.b16 %v104, %v104
    %v121 = vpack.c.b16 %v105, %v105
    %v122 = vpack.c.b16 %v106, %v106
    %139 = vst [vmem:[#allocation2] sm:$0xf] %v107
    %140 = vst [vmem:[#allocation2 + $0x4] sm:$0xf] %v108
    %141 = vst [vmem:[#allocation2 + $0x8] sm:$0xf] %v109
    %142 = vst [vmem:[#allocation2 + $0xc] sm:$0xf] %v110
    %143 = vst [vmem:[#allocation2 + $0x10] sm:$0xf] %v111
    %144 = vst [vmem:[#allocation2 + $0x14] sm:$0xf] %v112
    %145 = vst [vmem:[#allocation2 + $0x18] sm:$0xf] %v113
    %146 = vst [vmem:[#allocation2 + $0x1c] sm:$0xf] %v114
    %147 = vst [vmem:[#allocation2 + $0x20] sm:$0xf] %v115
    %148 = vst [vmem:[#allocation2 + $0x24] sm:$0xf] %v116
    %149 = vst [vmem:[#allocation2 + $0x28] sm:$0xf] %v117
    %150 = vst [vmem:[#allocation2 + $0x2c] sm:$0xf] %v118
    %151 = vst [vmem:[#allocation2 + $0x30] sm:$0xf] %v119
    %152 = vst [vmem:[#allocation2 + $0x34] sm:$0xf] %v120
    %153 = vst [vmem:[#allocation2 + $0x38] sm:$0xf] %v121
    %154 = vst [vmem:[#allocation2 + $0x3c] sm:$0xf] %v122
    %p155 = scmp.eq.s32.totalorder 0, 0
    // Predicated region
    $region14: #{encoder_forward.17} parent=1 // pred_check
      %p156 = pneg %p155
    $region15: #{encoder_forward.17} parent=1 // pred_check_branch
      %158 = sbr.rel (%p156) target = $region17
    $region16: #{encoder_forward.17} parent=1 // pred_region
      %159 = vst [vmem:[%s3] sm:$0xff] 0.0
    $region17: #{encoder_forward.17} parent=1 // pred_fallthru
      _
    %v160 = vld [vmem:[%s3] sm:$0xff]
    %v161 = vld [vmem:[%s2] sm:$0xff]
    %162 = vmatprep.subr.mxu0 0.0
    %163 = vmatpush1.msra.mxu0 %v74
    %164 = vmatprep.subr.mxu0 0.0
    %165 = vmatpush1.msra.mxu0 %v73
    %166 = vmatprep.subr.mxu0 0.0
    %167 = vmatpush1.msra.mxu0 %v72
    %168 = vmatprep.subr.mxu0 0.0
    %169 = vmatpush1.msra.mxu0 %v71
    %170 = vmatprep.subr.mxu0 0.0
    %171 = vmatpush1.msra.mxu0 %v70
    %172 = vmatprep.subr.mxu0 0.0
    %173 = vmatpush1.msra.mxu0 %v69
    %174 = vmatprep.subr.mxu0 0.0
    %175 = vmatpush1.msra.mxu0 %v68
    %176 = vmatprep.subr.mxu0 0.0
    %177 = vmatpush1.msra.mxu0 %v67
    %178 = vmatprep.subr.mxu0 0.0
    %179 = vmatpush1.msra.mxu0 %v66
    %180 = vmatprep.subr.mxu0 0.0
    %181 = vmatpush1.msra.mxu0 %v65
    %182 = vmatprep.subr.mxu0 0.0
    %183 = vmatpush1.msra.mxu0 %v64
    %184 = vmatprep.subr.mxu0 0.0
    %185 = vmatpush1.msra.mxu0 %v63
    %186 = vmatprep.subr.mxu0 0.0
    %187 = vmatpush1.msra.mxu0 %v62
    %188 = vmatprep.subr.mxu0 0.0
    %189 = vmatpush1.msra.mxu0 %v61
    %190 = vmatprep.subr.mxu0 0.0
    %191 = vmatpush1.msra.mxu0 %v60
    %192 = vmatprep.subr.mxu0 0.0
    %193 = vmatpush1.msra.mxu0 %v59
    %194 = vmatprep.subr.mxu0 0.0
    %195 = vmatpush2.msra.mxu0 0.0
    %196 = vmatprep.subr.mxu0 0.0
    %197 = vmatpush2.msra.mxu0 0.0
    %198 = vmatprep.subr.mxu0 0.0
    %199 = vmatpush2.msra.mxu0 0.0
    %200 = vmatprep.subr.mxu0 0.0
    %201 = vmatpush2.msra.mxu0 0.0
    %202 = vmatprep.subr.mxu0 0.0
    %203 = vmatpush2.msra.mxu0 0.0
    %204 = vmatprep.subr.mxu0 0.0
    %205 = vmatpush2.msra.mxu0 0.0
    %206 = vmatprep.subr.mxu0 0.0
    %207 = vmatpush2.msra.mxu0 0.0
    %208 = vmatprep.subr.mxu0 0.0
    %209 = vmatpush2.msra.mxu0 0.0
    %210 = vmatprep.subr.mxu0 0.0
    %211 = vmatpush2.msra.mxu0 0.0
    %212 = vmatprep.subr.mxu0 0.0
    %213 = vmatpush2.msra.mxu0 0.0
    %214 = vmatprep.subr.mxu0 0.0
    %215 = vmatpush2.msra.mxu0 0.0
    %216 = vmatprep.subr.mxu0 0.0
    %217 = vmatpush2.msra.mxu0 0.0
    %218 = vmatprep.subr.mxu0 0.0
    %219 = vmatpush2.msra.mxu0 0.0
    %220 = vmatprep.subr.mxu0 0.0
    %221 = vmatpush2.msra.mxu0 0.0
    %222 = vmatprep.subr.mxu0 0.0
    %223 = vmatpush2.msra.mxu0 0.0
    %224 = vmatprep.subr.mxu0 0.0
    %225 = vmatpush2.msra.mxu0 0.0
    %226 = vmatprep.mubr.f32.mxu0 0.0
    %227 = vmatmul.mubr.f32.gmra.mxu0 %v161
    %v228 = vpop.f32.mrf.mxu0
    %v229 = vadd.f32 0.0, %v228
    %v230 = vpop.f32.mrf.mxu0
    %231 = vdwg.mxu0
    %v232 = vadd.f32 %v160, %v229
    %233 = vst [vmem:[%s3] sm:$0xff] %v232
    // Predicated region
    $region18: #{encoder_forward.17} parent=1 // pred_check
      _
    $region19: #{encoder_forward.17} parent=1 // pred_check_branch
      %235 = sbr.rel (0) target = $region21
    $region20: #{encoder_forward.17} parent=1 // pred_region
      _
    $region21: #{encoder_forward.17} parent=1 // pred_fallthru
      _
    // Predicated region
    $region22: #{encoder_forward.17} parent=1 // pred_check
      _
    $region23: #{encoder_forward.17} parent=1 // pred_check_branch
      %237 = sbr.rel (0) target = $region25
    $region24: #{encoder_forward.17} parent=1 // pred_region
      %s239 = ssub.s32 1024, 1024
      %240 = vsyncadd [#allocation3], %s239
      %s241 = sshll.u32 [#allocation2], 4
      %s242 = int_to_ptr.vmem [resolvable:$true] %s241
      %247 = dma.vmem_to_hbm [thread:$0]  %s242, 1024, %s4, [#allocation3], 64, 64, 4
    $region25: #{encoder_forward.17} parent=1 // pred_fallthru
      _
    // Predicated region
    $region26: #{encoder_forward.17} parent=1 // pred_check
      _
    $region27: #{encoder_forward.17} parent=1 // pred_check_branch
      %249 = sbr.rel (0) target = $region29
    $region28: #{encoder_forward.17} parent=1 // pred_region
      _
    $region29: #{encoder_forward.17} parent=1 // pred_fallthru
      _
    // Predicated region
    $region30: #{encoder_forward.17} parent=1 // pred_check
      _
    $region31: #{encoder_forward.17} parent=1 // pred_check_branch
      %251 = sbr.rel (0) target = $region33
    $region32: #{encoder_forward.17} parent=1 // pred_region
      %252 = dma.done [#allocation3], 1024
    $region33: #{encoder_forward.17} parent=1 // pred_fallthru
      _
    %253 = vsyncpa [#allocation3], 1

</llo_original>
